<compile_context>
chip_gen: v5e
topology: v5e:2x2
jax: 0.10.0
libtpu: 0.0.40
codegen_flags: <defaults>
</compile_context>

<pallas_src>
import jax
import jax.numpy as jnp
from jax import lax
from jax.experimental import pallas as pl
from jax.experimental.pallas import tpu as pltpu

C1, C2, K1, K2, HID, NCLS = 16, 32, 7, 5, 64, 2
PAD1, PAD2 = 3, 2

K1COL = K1 + 3                      # 10 input taps cover 4 conv1 positions (= 1 pooled pair)

# ---- packed-parameter blob layouts (row offsets) ----
# blob64: lane width 64  (= 4*C1 = 2*C2)
R_W1, R_B1, R_B2, R_W2 = 0, K1COL, K1COL + 1, 16          # W2 starts at an aligned row
BLOB64_ROWS = R_W2 + 6 * C1                               # 16 + 96 = 112
# blob256: lane width 4*HID = 256
R_WIH, R_WHH, R_BIAS = 0, C2, C2 + HID                    # 0, 32, 96
BLOB256_ROWS = C2 + HID + 1                                # 97
# blobfc: lane width NCLS
R_FCW, R_FCB = 0, HID
BLOBFC_ROWS = HID + 1

OFF = 8                              # sublane-aligned start row of pool1 data in the scratch


# ---------------------------------------------------------------------------
# Fused kernel: CNN stack + LSTM + FC for the whole (small) batch at once.
# ---------------------------------------------------------------------------
def cnn_lstm_kernel(xcol_ref, w64_ref, w256_ref, fc_ref, out_ref, h1p_ref):
    # xcol_ref: (T*B, 10)   conv1 im2col, TIME-MAJOR rows (row t*B+b = xpad[b, 4t:4t+10])
    # w64_ref:  (112, 64)   packed conv1/conv2 weights + biases
    # w256_ref: (97, 256)   packed W_ih^T, W_hh^T, (b_ih+b_hh)
    # fc_ref:   (65, NCLS)  packed fc weight^T and bias
    # out_ref:  (B, NCLS)
    # h1p_ref:  (OFF + T*B + OFF, 2*C1)  zero-padded pool1 output (scratch)
    TB = xcol_ref.shape[0]
    B = out_ref.shape[0]
    T = TB // B

    # ---- Conv1(1->16,k=7,p=3) + ReLU + MaxPool(2): one MXU dot + one 32-lane-half max ----
    # Output lane layout of y1: [pos 4t | pos 4t+2 | pos 4t+1 | pos 4t+3] so the max of the
    # two 32-lane halves is directly the pooled pair (2t, 2t+1) in lane-pair layout.
    W1 = w64_ref[R_W1:R_W1 + K1COL, :]                                  # (10, 64)
    b1 = w64_ref[R_B1:R_B1 + 1, :]                                      # (1, 64)
    y1 = jnp.dot(xcol_ref[...], W1, preferred_element_type=jnp.float32) + b1
    h1 = jnp.maximum(jnp.maximum(y1[:, :2 * C1], y1[:, 2 * C1:]), 0.0)  # (TB, 32)

    # ---- padded, sublane-aligned store (one pad pair-row per side, zero only pad rows) ----
    h1p_ref[OFF:OFF + TB, :] = h1
    h1p_ref[OFF - B:OFF, :] = jnp.zeros((B, 2 * C1), jnp.float32)
    h1p_ref[OFF + TB:OFF + TB + B, :] = jnp.zeros((B, 2 * C1), jnp.float32)

    # ---- Conv2(16->32,k=5,p=2) + ReLU + MaxPool(2): three shifted stride-1 dots ----
    # Row j=t*B+b needs pool1 pairs t-1, t, t+1 of batch b -> row offsets -B, 0, +B.
    b2 = w64_ref[R_B2:R_B2 + 1, :]                                      # (1, 64)
    y2 = b2 + (
        jnp.dot(h1p_ref[OFF - B:OFF - B + TB, :],
                w64_ref[R_W2 + 0 * 2 * C1:R_W2 + 1 * 2 * C1, :],
                preferred_element_type=jnp.float32)
        + jnp.dot(h1p_ref[OFF:OFF + TB, :],
                  w64_ref[R_W2 + 1 * 2 * C1:R_W2 + 2 * 2 * C1, :],
                  preferred_element_type=jnp.float32)
        + jnp.dot(h1p_ref[OFF + B:OFF + B + TB, :],
                  w64_ref[R_W2 + 2 * 2 * C1:R_W2 + 3 * 2 * C1, :],
                  preferred_element_type=jnp.float32))
    h2 = jnp.maximum(jnp.maximum(y2[:, :C2], y2[:, C2:]), 0.0)          # (TB, 32) = LSTM input

    # ---- LSTM input projection hoisted out of the recurrence: one dot for all steps ----
    g_all = (jnp.dot(h2, w256_ref[R_WIH:R_WIH + C2, :],
                     preferred_element_type=jnp.float32)
             + w256_ref[R_BIAS:R_BIAS + 1, :])                          # (TB, 256) time-major
    whh = w256_ref[R_WHH:R_WHH + HID, :]                                # (64, 256)

    # ---- recurrence batched over B: one (B,64)@(64,256) dot per step ----
    h = jnp.zeros((B, HID), jnp.float32)
    c = jnp.zeros((B, HID), jnp.float32)
    for t in range(T):
        # keep the g_t add adjacent to the dot (MRB accumulate on v7x)
        gates = g_all[t * B:(t + 1) * B, :] + jnp.dot(
            h, whh, preferred_element_type=jnp.float32)
        ig = 0.5 * jnp.tanh(0.5 * gates[:, 0 * HID:1 * HID]) + 0.5      # sigmoid via EUP tanh
        fg = 0.5 * jnp.tanh(0.5 * gates[:, 1 * HID:2 * HID]) + 0.5
        gg = jnp.tanh(gates[:, 2 * HID:3 * HID])
        og = 0.5 * jnp.tanh(0.5 * gates[:, 3 * HID:4 * HID]) + 0.5
        c = fg * c + ig * gg
        h = og * jnp.tanh(c)

    # ---- fc(hn[-1]) for the whole batch: one dot + one store ----
    out_ref[...] = (jnp.dot(h, fc_ref[R_FCW:R_FCW + HID, :],
                            preferred_element_type=jnp.float32)
                    + fc_ref[R_FCB:R_FCB + 1, :])


# ---------------------------------------------------------------------------
# One-time parameter packing (outside the per-call jitted path).
# ---------------------------------------------------------------------------
def pack_params(params):
    (w1, b1, w2, b2, wih, whh, bih, bhh, fcw, fcb) = params

    # conv1 packed weight: lane blocks = [pos 4t | pos 4t+2 | pos 4t+1 | pos 4t+3]
    w1m = jnp.transpose(w1[:, 0, :], (1, 0)).astype(jnp.float32)        # (K1, C1)
    W1 = jnp.zeros((K1COL, 4 * C1), jnp.float32)
    W1 = W1.at[0:K1, 0 * C1:1 * C1].set(w1m)        # conv position 4t     (taps 0..6)
    W1 = W1.at[2:2 + K1, 1 * C1:2 * C1].set(w1m)    # conv position 4t+2   (taps 2..8)
    W1 = W1.at[1:1 + K1, 2 * C1:3 * C1].set(w1m)    # conv position 4t+1   (taps 1..7)
    W1 = W1.at[3:3 + K1, 3 * C1:4 * C1].set(w1m)    # conv position 4t+3   (taps 3..9)
    b1row = jnp.tile(b1.astype(jnp.float32), 4)                          # (64,)

    # conv2 packed weight: 6 pool1-position blocks x [even | odd] conv2 phases
    w2m = jnp.transpose(w2, (2, 1, 0)).astype(jnp.float32)               # (K2, C1, C2)
    W2 = jnp.zeros((6 * C1, 2 * C2), jnp.float32)
    for k in range(K2):
        W2 = W2.at[k * C1:(k + 1) * C1, 0:C2].set(w2m[k])                # even phase (pos 2t)
        W2 = W2.at[(k + 1) * C1:(k + 2) * C1, C2:2 * C2].set(w2m[k])     # odd phase (pos 2t+1)
    b2row = jnp.tile(b2.astype(jnp.float32), 2)                          # (64,)

    blob64 = jnp.zeros((BLOB64_ROWS, 4 * C1), jnp.float32)
    blob64 = blob64.at[R_W1:R_W1 + K1COL, :].set(W1)
    blob64 = blob64.at[R_B1, :].set(b1row)
    blob64 = blob64.at[R_B2, :].set(b2row)
    blob64 = blob64.at[R_W2:R_W2 + 6 * C1, :].set(W2)

    blob256 = jnp.zeros((BLOB256_ROWS, 4 * HID), jnp.float32)
    blob256 = blob256.at[R_WIH:R_WIH + C2, :].set(wih.T.astype(jnp.float32))
    blob256 = blob256.at[R_WHH:R_WHH + HID, :].set(whh.T.astype(jnp.float32))
    blob256 = blob256.at[R_BIAS, :].set((bih + bhh).astype(jnp.float32))

    blobfc = jnp.zeros((BLOBFC_ROWS, NCLS), jnp.float32)
    blobfc = blobfc.at[R_FCW:R_FCW + HID, :].set(fcw.T.astype(jnp.float32))
    blobfc = blobfc.at[R_FCB, :].set(fcb.astype(jnp.float32))
    return blob64, blob256, blobfc


# ---------------------------------------------------------------------------
# Per-call wrapper: conv1 im2col (data dependent) + one gridless pallas_call.
# ---------------------------------------------------------------------------
def cnn_lstm_forward(x, blob64, blob256, blobfc):
    B, cin, L = x.shape
    assert cin == 1 and L % 4 == 0 and B <= OFF
    T = L // 4

    # conv1 im2col, TIME-MAJOR rows: row t*B+b = xpad[b, 4t : 4t+10]
    xp = jnp.pad(x[:, 0, :].astype(jnp.float32), ((0, 0), (PAD1, PAD1)))        # (B, L+6)
    cols = [xp[:, j:j + 4 * (T - 1) + 1:4] for j in range(K1COL)]               # each (B, T)
    xcol = jnp.transpose(jnp.stack(cols, axis=-1), (1, 0, 2)).reshape(T * B, K1COL)

    out = pl.pallas_call(
        cnn_lstm_kernel,
        out_shape=jax.ShapeDtypeStruct((B, NCLS), jnp.float32),
        in_specs=[
            pl.BlockSpec(memory_space=pltpu.MemorySpace.VMEM),
            pl.BlockSpec(memory_space=pltpu.MemorySpace.VMEM),
            pl.BlockSpec(memory_space=pltpu.MemorySpace.VMEM),
            pl.BlockSpec(memory_space=pltpu.MemorySpace.VMEM),
        ],
        out_specs=pl.BlockSpec(memory_space=pltpu.MemorySpace.VMEM),
        scratch_shapes=[pltpu.VMEM((OFF + T * B + OFF, 2 * C1), jnp.float32)],
    )(xcol, blob64, blob256, blobfc)
    return out


# ---------------------------------------------------------------------------
# Pure-JAX reference (mirrors torch semantics) for a correctness check
# ---------------------------------------------------------------------------
def reference_forward(x, params):
    (w1, b1, w2, b2, wih, whh, bih, bhh, fcw, fcb) = params
    dn1 = lax.conv_dimension_numbers(x.shape, w1.shape, ('NCH', 'OIH', 'NCH'))
    y = lax.conv_general_dilated(x, w1, (1,), [(PAD1, PAD1)], dimension_numbers=dn1,
                                 precision=lax.Precision.HIGHEST)
    y = jnp.maximum(y + b1[None, :, None], 0.0)
    B, C, L = y.shape
    y = jnp.max(y.reshape(B, C, L // 2, 2), axis=-1)
    dn2 = lax.conv_dimension_numbers(y.shape, w2.shape, ('NCH', 'OIH', 'NCH'))
    y = lax.conv_general_dilated(y, w2, (1,), [(PAD2, PAD2)], dimension_numbers=dn2,
                                 precision=lax.Precision.HIGHEST)
    y = jnp.maximum(y + b2[None, :, None], 0.0)
    B, C, L = y.shape
    y = jnp.max(y.reshape(B, C, L // 2, 2), axis=-1)
    seq = jnp.transpose(y, (2, 0, 1))            # (T, B, C)

    def cell(carry, x_t):
        h, c = carry
        gates = (jnp.dot(x_t, wih.T, precision=lax.Precision.HIGHEST)
                 + jnp.dot(h, whh.T, precision=lax.Precision.HIGHEST)
                 + bih + bhh)
        i = jax.nn.sigmoid(gates[:, :HID])
        f = jax.nn.sigmoid(gates[:, HID:2 * HID])
        g = jnp.tanh(gates[:, 2 * HID:3 * HID])
        o = jax.nn.sigmoid(gates[:, 3 * HID:])
        c = f * c + i * g
        h = o * jnp.tanh(c)
        return (h, c), None

    h0 = jnp.zeros((x.shape[0], HID), jnp.float32)
    (h, _), _ = lax.scan(cell, (h0, jnp.zeros_like(h0)), seq)
    return jnp.dot(h, fcw.T, precision=lax.Precision.HIGHEST) + fcb[None, :]


if __name__ == "__main__":
    key = jax.random.PRNGKey(0)
    keys = jax.random.split(key, 11)
    B, L = 2, 64   # small shapes consistent with the module (length only needs L % 4 == 0)

    # Deterministic synthetic parameters (shapes from CNNLSTM.__init__)
    w1 = 0.3 * jax.random.normal(keys[0], (C1, 1, K1), jnp.float32)
    b1 = 0.1 * jax.random.normal(keys[1], (C1,), jnp.float32)
    w2 = 0.2 * jax.random.normal(keys[2], (C2, C1, K2), jnp.float32)
    b2 = 0.1 * jax.random.normal(keys[3], (C2,), jnp.float32)
    wih = 0.2 * jax.random.normal(keys[4], (4 * HID, C2), jnp.float32)
    whh = 0.2 * jax.random.normal(keys[5], (4 * HID, HID), jnp.float32)
    bih = 0.1 * jax.random.normal(keys[6], (4 * HID,), jnp.float32)
    bhh = 0.1 * jax.random.normal(keys[7], (4 * HID,), jnp.float32)
    fcw = 0.3 * jax.random.normal(keys[8], (NCLS, HID), jnp.float32)
    fcb = 0.1 * jax.random.normal(keys[9], (NCLS,), jnp.float32)
    params = (w1, b1, w2, b2, wih, whh, bih, bhh, fcw, fcb)

    x = jax.random.normal(keys[10], (B, 1, L), jnp.float32)

    packed = pack_params(params)                     # one-time packing, outside jit
    fwd = jax.jit(cnn_lstm_forward)
    out = jax.block_until_ready(fwd(x, *packed))

    ref = reference_forward(x, params)
    err = float(jnp.max(jnp.abs(out - ref)))
    assert out.shape == (B, NCLS), out.shape
    assert err < 5e-3, f"max abs err {err}"
    print("KERNEL_OK")
</pallas_src>

<mosaic_0001>
module attributes {stable_mosaic.version = 11 : i64} {
  func.func @cnn_lstm_kernel(%arg0: memref<32x10xf32, #tpu.memory_space<vmem>>, %arg1: memref<112x64xf32, #tpu.memory_space<vmem>>, %arg2: memref<97x256xf32, #tpu.memory_space<vmem>>, %arg3: memref<65x2xf32, #tpu.memory_space<vmem>>, %arg4: memref<2x2xf32, #tpu.memory_space<vmem>>, %arg5: memref<48x32xf32, #tpu.memory_space<vmem>>) attributes {dimension_semantics = [], scalar_prefetch = 0 : i64, scratch_operands = 1 : i64, tpu.core_type = #tpu.core_type<tc>} {
    %c0 = arith.constant 0 : index
    %c0_0 = arith.constant 0 : index
    %0 = vector.load %arg1[%c0, %c0_0] : memref<112x64xf32, #tpu.memory_space<vmem>>, vector<10x64xf32>
    %c10 = arith.constant 10 : index
    %c0_1 = arith.constant 0 : index
    %1 = vector.load %arg1[%c10, %c0_1] : memref<112x64xf32, #tpu.memory_space<vmem>>, vector<1x64xf32>
    %c0_2 = arith.constant 0 : index
    %c0_3 = arith.constant 0 : index
    %2 = vector.load %arg0[%c0_2, %c0_3] : memref<32x10xf32, #tpu.memory_space<vmem>>, vector<32x10xf32>
    %cst = arith.constant dense<0.000000e+00> : vector<32x64xf32>
    %3 = tpu.matmul %2, %0, %cst {dimension_numbers = #tpu.dot_dimension_numbers<[1], [0], [0], [1], [0, 0, 1, 1], [], []>} : vector<32x10xf32>, vector<10x64xf32>, vector<32x64xf32> -> vector<32x64xf32>
    %4 = vector.broadcast %1 : vector<1x64xf32> to vector<32x64xf32>
    %5 = arith.addf %3, %4 : vector<32x64xf32>
    %6 = vector.extract_strided_slice %5 {offsets = [0, 0], sizes = [32, 32], strides = [1, 1]} : vector<32x64xf32> to vector<32x32xf32>
    %7 = vector.extract_strided_slice %5 {offsets = [0, 32], sizes = [32, 32], strides = [1, 1]} : vector<32x64xf32> to vector<32x32xf32>
    %8 = arith.maximumf %6, %7 : vector<32x32xf32>
    %cst_4 = arith.constant 0.000000e+00 : f32
    %9 = vector.broadcast %cst_4 : f32 to vector<32x32xf32>
    %10 = arith.maximumf %8, %9 : vector<32x32xf32>
    %c8 = arith.constant 8 : index
    %c0_5 = arith.constant 0 : index
    %11 = vector.load %arg5[%c8, %c0_5] : memref<48x32xf32, #tpu.memory_space<vmem>>, vector<32x32xf32>
    tpu.vector_store %arg5[%c8, %c0_5], %10 {strides = array<i32>} : memref<48x32xf32, #tpu.memory_space<vmem>>, vector<32x32xf32>,
    %cst_6 = arith.constant 0.000000e+00 : f32
    %12 = vector.broadcast %cst_6 : f32 to vector<2x32xf32>
    %c6 = arith.constant 6 : index
    %c0_7 = arith.constant 0 : index
    %13 = vector.load %arg5[%c6, %c0_7] : memref<48x32xf32, #tpu.memory_space<vmem>>, vector<2x32xf32>
    tpu.vector_store %arg5[%c6, %c0_7], %12 {strides = array<i32>} : memref<48x32xf32, #tpu.memory_space<vmem>>, vector<2x32xf32>,
    %cst_8 = arith.constant 0.000000e+00 : f32
    %14 = vector.broadcast %cst_8 : f32 to vector<2x32xf32>
    %c40 = arith.constant 40 : index
    %c0_9 = arith.constant 0 : index
    %15 = vector.load %arg5[%c40, %c0_9] : memref<48x32xf32, #tpu.memory_space<vmem>>, vector<2x32xf32>
    tpu.vector_store %arg5[%c40, %c0_9], %14 {strides = array<i32>} : memref<48x32xf32, #tpu.memory_space<vmem>>, vector<2x32xf32>,
    %c11 = arith.constant 11 : index
    %c0_10 = arith.constant 0 : index
    %16 = vector.load %arg1[%c11, %c0_10] : memref<112x64xf32, #tpu.memory_space<vmem>>, vector<1x64xf32>
    %c6_11 = arith.constant 6 : index
    %c0_12 = arith.constant 0 : index
    %17 = vector.load %arg5[%c6_11, %c0_12] : memref<48x32xf32, #tpu.memory_space<vmem>>, vector<32x32xf32>
    %c16 = arith.constant 16 : index
    %c0_13 = arith.constant 0 : index
    %18 = vector.load %arg1[%c16, %c0_13] : memref<112x64xf32, #tpu.memory_space<vmem>>, vector<32x64xf32>
    %cst_14 = arith.constant dense<0.000000e+00> : vector<32x64xf32>
    %19 = tpu.matmul %17, %18, %cst_14 {dimension_numbers = #tpu.dot_dimension_numbers<[1], [0], [0], [1], [0, 0, 1, 1], [], []>} : vector<32x32xf32>, vector<32x64xf32>, vector<32x64xf32> -> vector<32x64xf32>
    %c8_15 = arith.constant 8 : index
    %c0_16 = arith.constant 0 : index
    %20 = vector.load %arg5[%c8_15, %c0_16] : memref<48x32xf32, #tpu.memory_space<vmem>>, vector<32x32xf32>
    %c48 = arith.constant 48 : index
    %c0_17 = arith.constant 0 : index
    %21 = vector.load %arg1[%c48, %c0_17] : memref<112x64xf32, #tpu.memory_space<vmem>>, vector<32x64xf32>
    %cst_18 = arith.constant dense<0.000000e+00> : vector<32x64xf32>
    %22 = tpu.matmul %20, %21, %cst_18 {dimension_numbers = #tpu.dot_dimension_numbers<[1], [0], [0], [1], [0, 0, 1, 1], [], []>} : vector<32x32xf32>, vector<32x64xf32>, vector<32x64xf32> -> vector<32x64xf32>
    %23 = arith.addf %19, %22 : vector<32x64xf32>
    %c10_19 = arith.constant 10 : index
    %c0_20 = arith.constant 0 : index
    %24 = vector.load %arg5[%c10_19, %c0_20] : memref<48x32xf32, #tpu.memory_space<vmem>>, vector<32x32xf32>
    %c80 = arith.constant 80 : index
    %c0_21 = arith.constant 0 : index
    %25 = vector.load %arg1[%c80, %c0_21] : memref<112x64xf32, #tpu.memory_space<vmem>>, vector<32x64xf32>
    %cst_22 = arith.constant dense<0.000000e+00> : vector<32x64xf32>
    %26 = tpu.matmul %24, %25, %cst_22 {dimension_numbers = #tpu.dot_dimension_numbers<[1], [0], [0], [1], [0, 0, 1, 1], [], []>} : vector<32x32xf32>, vector<32x64xf32>, vector<32x64xf32> -> vector<32x64xf32>
    %27 = arith.addf %23, %26 : vector<32x64xf32>
    %28 = vector.broadcast %16 : vector<1x64xf32> to vector<32x64xf32>
    %29 = arith.addf %28, %27 : vector<32x64xf32>
    %30 = vector.extract_strided_slice %29 {offsets = [0, 0], sizes = [32, 32], strides = [1, 1]} : vector<32x64xf32> to vector<32x32xf32>
    %31 = vector.extract_strided_slice %29 {offsets = [0, 32], sizes = [32, 32], strides = [1, 1]} : vector<32x64xf32> to vector<32x32xf32>
    %32 = arith.maximumf %30, %31 : vector<32x32xf32>
    %cst_23 = arith.constant 0.000000e+00 : f32
    %33 = vector.broadcast %cst_23 : f32 to vector<32x32xf32>
    %34 = arith.maximumf %32, %33 : vector<32x32xf32>
    %c0_24 = arith.constant 0 : index
    %c0_25 = arith.constant 0 : index
    %35 = vector.load %arg2[%c0_24, %c0_25] : memref<97x256xf32, #tpu.memory_space<vmem>>, vector<32x256xf32>
    %cst_26 = arith.constant dense<0.000000e+00> : vector<32x256xf32>
    %36 = tpu.matmul %34, %35, %cst_26 {dimension_numbers = #tpu.dot_dimension_numbers<[1], [0], [0], [1], [0, 0, 1, 1], [], []>} : vector<32x32xf32>, vector<32x256xf32>, vector<32x256xf32> -> vector<32x256xf32>
    %c96 = arith.constant 96 : index
    %c0_27 = arith.constant 0 : index
    %37 = vector.load %arg2[%c96, %c0_27] : memref<97x256xf32, #tpu.memory_space<vmem>>, vector<1x256xf32>
    %38 = vector.broadcast %37 : vector<1x256xf32> to vector<32x256xf32>
    %39 = arith.addf %36, %38 : vector<32x256xf32>
    %c32 = arith.constant 32 : index
    %c0_28 = arith.constant 0 : index
    %40 = vector.load %arg2[%c32, %c0_28] : memref<97x256xf32, #tpu.memory_space<vmem>>, vector<64x256xf32>
    %cst_29 = arith.constant 0.000000e+00 : f32
    %41 = vector.broadcast %cst_29 : f32 to vector<2x64xf32>
    %cst_30 = arith.constant 0.000000e+00 : f32
    %42 = vector.broadcast %cst_30 : f32 to vector<2x64xf32>
    %43 = vector.extract_strided_slice %39 {offsets = [0, 0], sizes = [2, 256], strides = [1, 1]} : vector<32x256xf32> to vector<2x256xf32>
    %cst_31 = arith.constant dense<0.000000e+00> : vector<2x256xf32>
    %44 = tpu.matmul %41, %40, %cst_31 {dimension_numbers = #tpu.dot_dimension_numbers<[1], [0], [0], [1], [0, 0, 1, 1], [], []>} : vector<2x64xf32>, vector<64x256xf32>, vector<2x256xf32> -> vector<2x256xf32>
    %45 = arith.addf %43, %44 : vector<2x256xf32>
    %46 = vector.extract_strided_slice %45 {offsets = [0, 0], sizes = [2, 64], strides = [1, 1]} : vector<2x256xf32> to vector<2x64xf32>
    %cst_32 = arith.constant 5.000000e-01 : f32
    %47 = vector.broadcast %cst_32 : f32 to vector<2x64xf32>
    %48 = arith.mulf %47, %46 : vector<2x64xf32>
    %49 = math.tanh %48 : vector<2x64xf32>
    %cst_33 = arith.constant 5.000000e-01 : f32
    %50 = vector.broadcast %cst_33 : f32 to vector<2x64xf32>
    %51 = arith.mulf %50, %49 : vector<2x64xf32>
    %cst_34 = arith.constant 5.000000e-01 : f32
    %52 = vector.broadcast %cst_34 : f32 to vector<2x64xf32>
    %53 = arith.addf %51, %52 : vector<2x64xf32>
    %54 = vector.extract_strided_slice %45 {offsets = [0, 64], sizes = [2, 64], strides = [1, 1]} : vector<2x256xf32> to vector<2x64xf32>
    %cst_35 = arith.constant 5.000000e-01 : f32
    %55 = vector.broadcast %cst_35 : f32 to vector<2x64xf32>
    %56 = arith.mulf %55, %54 : vector<2x64xf32>
    %57 = math.tanh %56 : vector<2x64xf32>
    %cst_36 = arith.constant 5.000000e-01 : f32
    %58 = vector.broadcast %cst_36 : f32 to vector<2x64xf32>
    %59 = arith.mulf %58, %57 : vector<2x64xf32>
    %cst_37 = arith.constant 5.000000e-01 : f32
    %60 = vector.broadcast %cst_37 : f32 to vector<2x64xf32>
    %61 = arith.addf %59, %60 : vector<2x64xf32>
    %62 = vector.extract_strided_slice %45 {offsets = [0, 128], sizes = [2, 64], strides = [1, 1]} : vector<2x256xf32> to vector<2x64xf32>
    %63 = math.tanh %62 : vector<2x64xf32>
    %64 = vector.extract_strided_slice %45 {offsets = [0, 192], sizes = [2, 64], strides = [1, 1]} : vector<2x256xf32> to vector<2x64xf32>
    %cst_38 = arith.constant 5.000000e-01 : f32
    %65 = vector.broadcast %cst_38 : f32 to vector<2x64xf32>
    %66 = arith.mulf %65, %64 : vector<2x64xf32>
    %67 = math.tanh %66 : vector<2x64xf32>
    %cst_39 = arith.constant 5.000000e-01 : f32
    %68 = vector.broadcast %cst_39 : f32 to vector<2x64xf32>
    %69 = arith.mulf %68, %67 : vector<2x64xf32>
    %cst_40 = arith.constant 5.000000e-01 : f32
    %70 = vector.broadcast %cst_40 : f32 to vector<2x64xf32>
    %71 = arith.addf %69, %70 : vector<2x64xf32>
    %72 = arith.mulf %61, %42 : vector<2x64xf32>
    %73 = arith.mulf %53, %63 : vector<2x64xf32>
    %74 = arith.addf %72, %73 : vector<2x64xf32>
    %75 = math.tanh %74 : vector<2x64xf32>
    %76 = arith.mulf %71, %75 : vector<2x64xf32>
    %77 = vector.extract_strided_slice %39 {offsets = [2, 0], sizes = [2, 256], strides = [1, 1]} : vector<32x256xf32> to vector<2x256xf32>
    %cst_41 = arith.constant dense<0.000000e+00> : vector<2x256xf32>
    %78 = tpu.matmul %76, %40, %cst_41 {dimension_numbers = #tpu.dot_dimension_numbers<[1], [0], [0], [1], [0, 0, 1, 1], [], []>} : vector<2x64xf32>, vector<64x256xf32>, vector<2x256xf32> -> vector<2x256xf32>
    %79 = arith.addf %77, %78 : vector<2x256xf32>
    %80 = vector.extract_strided_slice %79 {offsets = [0, 0], sizes = [2, 64], strides = [1, 1]} : vector<2x256xf32> to vector<2x64xf32>
    %cst_42 = arith.constant 5.000000e-01 : f32
    %81 = vector.broadcast %cst_42 : f32 to vector<2x64xf32>
    %82 = arith.mulf %81, %80 : vector<2x64xf32>
    %83 = math.tanh %82 : vector<2x64xf32>
    %cst_43 = arith.constant 5.000000e-01 : f32
    %84 = vector.broadcast %cst_43 : f32 to vector<2x64xf32>
    %85 = arith.mulf %84, %83 : vector<2x64xf32>
    %cst_44 = arith.constant 5.000000e-01 : f32
    %86 = vector.broadcast %cst_44 : f32 to vector<2x64xf32>
    %87 = arith.addf %85, %86 : vector<2x64xf32>
    %88 = vector.extract_strided_slice %79 {offsets = [0, 64], sizes = [2, 64], strides = [1, 1]} : vector<2x256xf32> to vector<2x64xf32>
    %cst_45 = arith.constant 5.000000e-01 : f32
    %89 = vector.broadcast %cst_45 : f32 to vector<2x64xf32>
    %90 = arith.mulf %89, %88 : vector<2x64xf32>
    %91 = math.tanh %90 : vector<2x64xf32>
    %cst_46 = arith.constant 5.000000e-01 : f32
    %92 = vector.broadcast %cst_46 : f32 to vector<2x64xf32>
    %93 = arith.mulf %92, %91 : vector<2x64xf32>
    %cst_47 = arith.constant 5.000000e-01 : f32
    %94 = vector.broadcast %cst_47 : f32 to vector<2x64xf32>
    %95 = arith.addf %93, %94 : vector<2x64xf32>
    %96 = vector.extract_strided_slice %79 {offsets = [0, 128], sizes = [2, 64], strides = [1, 1]} : vector<2x256xf32> to vector<2x64xf32>
    %97 = math.tanh %96 : vector<2x64xf32>
    %98 = vector.extract_strided_slice %79 {offsets = [0, 192], sizes = [2, 64], strides = [1, 1]} : vector<2x256xf32> to vector<2x64xf32>
    %cst_48 = arith.constant 5.000000e-01 : f32
    %99 = vector.broadcast %cst_48 : f32 to vector<2x64xf32>
    %100 = arith.mulf %99, %98 : vector<2x64xf32>
    %101 = math.tanh %100 : vector<2x64xf32>
    %cst_49 = arith.constant 5.000000e-01 : f32
    %102 = vector.broadcast %cst_49 : f32 to vector<2x64xf32>
    %103 = arith.mulf %102, %101 : vector<2x64xf32>
    %cst_50 = arith.constant 5.000000e-01 : f32
    %104 = vector.broadcast %cst_50 : f32 to vector<2x64xf32>
    %105 = arith.addf %103, %104 : vector<2x64xf32>
    %106 = arith.mulf %95, %74 : vector<2x64xf32>
    %107 = arith.mulf %87, %97 : vector<2x64xf32>
    %108 = arith.addf %106, %107 : vector<2x64xf32>
    %109 = math.tanh %108 : vector<2x64xf32>
    %110 = arith.mulf %105, %109 : vector<2x64xf32>
    %111 = vector.extract_strided_slice %39 {offsets = [4, 0], sizes = [2, 256], strides = [1, 1]} : vector<32x256xf32> to vector<2x256xf32>
    %cst_51 = arith.constant dense<0.000000e+00> : vector<2x256xf32>
    %112 = tpu.matmul %110, %40, %cst_51 {dimension_numbers = #tpu.dot_dimension_numbers<[1], [0], [0], [1], [0, 0, 1, 1], [], []>} : vector<2x64xf32>, vector<64x256xf32>, vector<2x256xf32> -> vector<2x256xf32>
    %113 = arith.addf %111, %112 : vector<2x256xf32>
    %114 = vector.extract_strided_slice %113 {offsets = [0, 0], sizes = [2, 64], strides = [1, 1]} : vector<2x256xf32> to vector<2x64xf32>
    %cst_52 = arith.constant 5.000000e-01 : f32
    %115 = vector.broadcast %cst_52 : f32 to vector<2x64xf32>
    %116 = arith.mulf %115, %114 : vector<2x64xf32>
    %117 = math.tanh %116 : vector<2x64xf32>
    %cst_53 = arith.constant 5.000000e-01 : f32
    %118 = vector.broadcast %cst_53 : f32 to vector<2x64xf32>
    %119 = arith.mulf %118, %117 : vector<2x64xf32>
    %cst_54 = arith.constant 5.000000e-01 : f32
    %120 = vector.broadcast %cst_54 : f32 to vector<2x64xf32>
    %121 = arith.addf %119, %120 : vector<2x64xf32>
    %122 = vector.extract_strided_slice %113 {offsets = [0, 64], sizes = [2, 64], strides = [1, 1]} : vector<2x256xf32> to vector<2x64xf32>
    %cst_55 = arith.constant 5.000000e-01 : f32
    %123 = vector.broadcast %cst_55 : f32 to vector<2x64xf32>
    %124 = arith.mulf %123, %122 : vector<2x64xf32>
    %125 = math.tanh %124 : vector<2x64xf32>
    %cst_56 = arith.constant 5.000000e-01 : f32
    %126 = vector.broadcast %cst_56 : f32 to vector<2x64xf32>
    %127 = arith.mulf %126, %125 : vector<2x64xf32>
    %cst_57 = arith.constant 5.000000e-01 : f32
    %128 = vector.broadcast %cst_57 : f32 to vector<2x64xf32>
    %129 = arith.addf %127, %128 : vector<2x64xf32>
    %130 = vector.extract_strided_slice %113 {offsets = [0, 128], sizes = [2, 64], strides = [1, 1]} : vector<2x256xf32> to vector<2x64xf32>
    %131 = math.tanh %130 : vector<2x64xf32>
    %132 = vector.extract_strided_slice %113 {offsets = [0, 192], sizes = [2, 64], strides = [1, 1]} : vector<2x256xf32> to vector<2x64xf32>
    %cst_58 = arith.constant 5.000000e-01 : f32
    %133 = vector.broadcast %cst_58 : f32 to vector<2x64xf32>
    %134 = arith.mulf %133, %132 : vector<2x64xf32>
    %135 = math.tanh %134 : vector<2x64xf32>
    %cst_59 = arith.constant 5.000000e-01 : f32
    %136 = vector.broadcast %cst_59 : f32 to vector<2x64xf32>
    %137 = arith.mulf %136, %135 : vector<2x64xf32>
    %cst_60 = arith.constant 5.000000e-01 : f32
    %138 = vector.broadcast %cst_60 : f32 to vector<2x64xf32>
    %139 = arith.addf %137, %138 : vector<2x64xf32>
    %140 = arith.mulf %129, %108 : vector<2x64xf32>
    %141 = arith.mulf %121, %131 : vector<2x64xf32>
    %142 = arith.addf %140, %141 : vector<2x64xf32>
    %143 = math.tanh %142 : vector<2x64xf32>
    %144 = arith.mulf %139, %143 : vector<2x64xf32>
    %145 = vector.extract_strided_slice %39 {offsets = [6, 0], sizes = [2, 256], strides = [1, 1]} : vector<32x256xf32> to vector<2x256xf32>
    %cst_61 = arith.constant dense<0.000000e+00> : vector<2x256xf32>
    %146 = tpu.matmul %144, %40, %cst_61 {dimension_numbers = #tpu.dot_dimension_numbers<[1], [0], [0], [1], [0, 0, 1, 1], [], []>} : vector<2x64xf32>, vector<64x256xf32>, vector<2x256xf32> -> vector<2x256xf32>
    %147 = arith.addf %145, %146 : vector<2x256xf32>
    %148 = vector.extract_strided_slice %147 {offsets = [0, 0], sizes = [2, 64], strides = [1, 1]} : vector<2x256xf32> to vector<2x64xf32>
    %cst_62 = arith.constant 5.000000e-01 : f32
    %149 = vector.broadcast %cst_62 : f32 to vector<2x64xf32>
    %150 = arith.mulf %149, %148 : vector<2x64xf32>
    %151 = math.tanh %150 : vector<2x64xf32>
    %cst_63 = arith.constant 5.000000e-01 : f32
    %152 = vector.broadcast %cst_63 : f32 to vector<2x64xf32>
    %153 = arith.mulf %152, %151 : vector<2x64xf32>
    %cst_64 = arith.constant 5.000000e-01 : f32
    %154 = vector.broadcast %cst_64 : f32 to vector<2x64xf32>
    %155 = arith.addf %153, %154 : vector<2x64xf32>
    %156 = vector.extract_strided_slice %147 {offsets = [0, 64], sizes = [2, 64], strides = [1, 1]} : vector<2x256xf32> to vector<2x64xf32>
    %cst_65 = arith.constant 5.000000e-01 : f32
    %157 = vector.broadcast %cst_65 : f32 to vector<2x64xf32>
    %158 = arith.mulf %157, %156 : vector<2x64xf32>
    %159 = math.tanh %158 : vector<2x64xf32>
    %cst_66 = arith.constant 5.000000e-01 : f32
    %160 = vector.broadcast %cst_66 : f32 to vector<2x64xf32>
    %161 = arith.mulf %160, %159 : vector<2x64xf32>
    %cst_67 = arith.constant 5.000000e-01 : f32
    %162 = vector.broadcast %cst_67 : f32 to vector<2x64xf32>
    %163 = arith.addf %161, %162 : vector<2x64xf32>
    %164 = vector.extract_strided_slice %147 {offsets = [0, 128], sizes = [2, 64], strides = [1, 1]} : vector<2x256xf32> to vector<2x64xf32>
    %165 = math.tanh %164 : vector<2x64xf32>
    %166 = vector.extract_strided_slice %147 {offsets = [0, 192], sizes = [2, 64], strides = [1, 1]} : vector<2x256xf32> to vector<2x64xf32>
    %cst_68 = arith.constant 5.000000e-01 : f32
    %167 = vector.broadcast %cst_68 : f32 to vector<2x64xf32>
    %168 = arith.mulf %167, %166 : vector<2x64xf32>
    %169 = math.tanh %168 : vector<2x64xf32>
    %cst_69 = arith.constant 5.000000e-01 : f32
    %170 = vector.broadcast %cst_69 : f32 to vector<2x64xf32>
    %171 = arith.mulf %170, %169 : vector<2x64xf32>
    %cst_70 = arith.constant 5.000000e-01 : f32
    %172 = vector.broadcast %cst_70 : f32 to vector<2x64xf32>
    %173 = arith.addf %171, %172 : vector<2x64xf32>
    %174 = arith.mulf %163, %142 : vector<2x64xf32>
    %175 = arith.mulf %155, %165 : vector<2x64xf32>
    %176 = arith.addf %174, %175 : vector<2x64xf32>
    %177 = math.tanh %176 : vector<2x64xf32>
    %178 = arith.mulf %173, %177 : vector<2x64xf32>
    %179 = vector.extract_strided_slice %39 {offsets = [8, 0], sizes = [2, 256], strides = [1, 1]} : vector<32x256xf32> to vector<2x256xf32>
    %cst_71 = arith.constant dense<0.000000e+00> : vector<2x256xf32>
    %180 = tpu.matmul %178, %40, %cst_71 {dimension_numbers = #tpu.dot_dimension_numbers<[1], [0], [0], [1], [0, 0, 1, 1], [], []>} : vector<2x64xf32>, vector<64x256xf32>, vector<2x256xf32> -> vector<2x256xf32>
    %181 = arith.addf %179, %180 : vector<2x256xf32>
    %182 = vector.extract_strided_slice %181 {offsets = [0, 0], sizes = [2, 64], strides = [1, 1]} : vector<2x256xf32> to vector<2x64xf32>
    %cst_72 = arith.constant 5.000000e-01 : f32
    %183 = vector.broadcast %cst_72 : f32 to vector<2x64xf32>
    %184 = arith.mulf %183, %182 : vector<2x64xf32>
    %185 = math.tanh %184 : vector<2x64xf32>
    %cst_73 = arith.constant 5.000000e-01 : f32
    %186 = vector.broadcast %cst_73 : f32 to vector<2x64xf32>
    %187 = arith.mulf %186, %185 : vector<2x64xf32>
    %cst_74 = arith.constant 5.000000e-01 : f32
    %188 = vector.broadcast %cst_74 : f32 to vector<2x64xf32>
    %189 = arith.addf %187, %188 : vector<2x64xf32>
    %190 = vector.extract_strided_slice %181 {offsets = [0, 64], sizes = [2, 64], strides = [1, 1]} : vector<2x256xf32> to vector<2x64xf32>
    %cst_75 = arith.constant 5.000000e-01 : f32
    %191 = vector.broadcast %cst_75 : f32 to vector<2x64xf32>
    %192 = arith.mulf %191, %190 : vector<2x64xf32>
    %193 = math.tanh %192 : vector<2x64xf32>
    %cst_76 = arith.constant 5.000000e-01 : f32
    %194 = vector.broadcast %cst_76 : f32 to vector<2x64xf32>
    %195 = arith.mulf %194, %193 : vector<2x64xf32>
    %cst_77 = arith.constant 5.000000e-01 : f32
    %196 = vector.broadcast %cst_77 : f32 to vector<2x64xf32>
    %197 = arith.addf %195, %196 : vector<2x64xf32>
    %198 = vector.extract_strided_slice %181 {offsets = [0, 128], sizes = [2, 64], strides = [1, 1]} : vector<2x256xf32> to vector<2x64xf32>
    %199 = math.tanh %198 : vector<2x64xf32>
    %200 = vector.extract_strided_slice %181 {offsets = [0, 192], sizes = [2, 64], strides = [1, 1]} : vector<2x256xf32> to vector<2x64xf32>
    %cst_78 = arith.constant 5.000000e-01 : f32
    %201 = vector.broadcast %cst_78 : f32 to vector<2x64xf32>
    %202 = arith.mulf %201, %200 : vector<2x64xf32>
    %203 = math.tanh %202 : vector<2x64xf32>
    %cst_79 = arith.constant 5.000000e-01 : f32
    %204 = vector.broadcast %cst_79 : f32 to vector<2x64xf32>
    %205 = arith.mulf %204, %203 : vector<2x64xf32>
    %cst_80 = arith.constant 5.000000e-01 : f32
    %206 = vector.broadcast %cst_80 : f32 to vector<2x64xf32>
    %207 = arith.addf %205, %206 : vector<2x64xf32>
    %208 = arith.mulf %197, %176 : vector<2x64xf32>
    %209 = arith.mulf %189, %199 : vector<2x64xf32>
    %210 = arith.addf %208, %209 : vector<2x64xf32>
    %211 = math.tanh %210 : vector<2x64xf32>
    %212 = arith.mulf %207, %211 : vector<2x64xf32>
    %213 = vector.extract_strided_slice %39 {offsets = [10, 0], sizes = [2, 256], strides = [1, 1]} : vector<32x256xf32> to vector<2x256xf32>
    %cst_81 = arith.constant dense<0.000000e+00> : vector<2x256xf32>
    %214 = tpu.matmul %212, %40, %cst_81 {dimension_numbers = #tpu.dot_dimension_numbers<[1], [0], [0], [1], [0, 0, 1, 1], [], []>} : vector<2x64xf32>, vector<64x256xf32>, vector<2x256xf32> -> vector<2x256xf32>
    %215 = arith.addf %213, %214 : vector<2x256xf32>
    %216 = vector.extract_strided_slice %215 {offsets = [0, 0], sizes = [2, 64], strides = [1, 1]} : vector<2x256xf32> to vector<2x64xf32>
    %cst_82 = arith.constant 5.000000e-01 : f32
    %217 = vector.broadcast %cst_82 : f32 to vector<2x64xf32>
    %218 = arith.mulf %217, %216 : vector<2x64xf32>
    %219 = math.tanh %218 : vector<2x64xf32>
    %cst_83 = arith.constant 5.000000e-01 : f32
    %220 = vector.broadcast %cst_83 : f32 to vector<2x64xf32>
    %221 = arith.mulf %220, %219 : vector<2x64xf32>
    %cst_84 = arith.constant 5.000000e-01 : f32
    %222 = vector.broadcast %cst_84 : f32 to vector<2x64xf32>
    %223 = arith.addf %221, %222 : vector<2x64xf32>
    %224 = vector.extract_strided_slice %215 {offsets = [0, 64], sizes = [2, 64], strides = [1, 1]} : vector<2x256xf32> to vector<2x64xf32>
    %cst_85 = arith.constant 5.000000e-01 : f32
    %225 = vector.broadcast %cst_85 : f32 to vector<2x64xf32>
    %226 = arith.mulf %225, %224 : vector<2x64xf32>
    %227 = math.tanh %226 : vector<2x64xf32>
    %cst_86 = arith.constant 5.000000e-01 : f32
    %228 = vector.broadcast %cst_86 : f32 to vector<2x64xf32>
    %229 = arith.mulf %228, %227 : vector<2x64xf32>
    %cst_87 = arith.constant 5.000000e-01 : f32
    %230 = vector.broadcast %cst_87 : f32 to vector<2x64xf32>
    %231 = arith.addf %229, %230 : vector<2x64xf32>
    %232 = vector.extract_strided_slice %215 {offsets = [0, 128], sizes = [2, 64], strides = [1, 1]} : vector<2x256xf32> to vector<2x64xf32>
    %233 = math.tanh %232 : vector<2x64xf32>
    %234 = vector.extract_strided_slice %215 {offsets = [0, 192], sizes = [2, 64], strides = [1, 1]} : vector<2x256xf32> to vector<2x64xf32>
    %cst_88 = arith.constant 5.000000e-01 : f32
    %235 = vector.broadcast %cst_88 : f32 to vector<2x64xf32>
    %236 = arith.mulf %235, %234 : vector<2x64xf32>
    %237 = math.tanh %236 : vector<2x64xf32>
    %cst_89 = arith.constant 5.000000e-01 : f32
    %238 = vector.broadcast %cst_89 : f32 to vector<2x64xf32>
    %239 = arith.mulf %238, %237 : vector<2x64xf32>
    %cst_90 = arith.constant 5.000000e-01 : f32
    %240 = vector.broadcast %cst_90 : f32 to vector<2x64xf32>
    %241 = arith.addf %239, %240 : vector<2x64xf32>
    %242 = arith.mulf %231, %210 : vector<2x64xf32>
    %243 = arith.mulf %223, %233 : vector<2x64xf32>
    %244 = arith.addf %242, %243 : vector<2x64xf32>
    %245 = math.tanh %244 : vector<2x64xf32>
    %246 = arith.mulf %241, %245 : vector<2x64xf32>
    %247 = vector.extract_strided_slice %39 {offsets = [12, 0], sizes = [2, 256], strides = [1, 1]} : vector<32x256xf32> to vector<2x256xf32>
    %cst_91 = arith.constant dense<0.000000e+00> : vector<2x256xf32>
    %248 = tpu.matmul %246, %40, %cst_91 {dimension_numbers = #tpu.dot_dimension_numbers<[1], [0], [0], [1], [0, 0, 1, 1], [], []>} : vector<2x64xf32>, vector<64x256xf32>, vector<2x256xf32> -> vector<2x256xf32>
    %249 = arith.addf %247, %248 : vector<2x256xf32>
    %250 = vector.extract_strided_slice %249 {offsets = [0, 0], sizes = [2, 64], strides = [1, 1]} : vector<2x256xf32> to vector<2x64xf32>
    %cst_92 = arith.constant 5.000000e-01 : f32
    %251 = vector.broadcast %cst_92 : f32 to vector<2x64xf32>
    %252 = arith.mulf %251, %250 : vector<2x64xf32>
    %253 = math.tanh %252 : vector<2x64xf32>
    %cst_93 = arith.constant 5.000000e-01 : f32
    %254 = vector.broadcast %cst_93 : f32 to vector<2x64xf32>
    %255 = arith.mulf %254, %253 : vector<2x64xf32>
    %cst_94 = arith.constant 5.000000e-01 : f32
    %256 = vector.broadcast %cst_94 : f32 to vector<2x64xf32>
    %257 = arith.addf %255, %256 : vector<2x64xf32>
    %258 = vector.extract_strided_slice %249 {offsets = [0, 64], sizes = [2, 64], strides = [1, 1]} : vector<2x256xf32> to vector<2x64xf32>
    %cst_95 = arith.constant 5.000000e-01 : f32
    %259 = vector.broadcast %cst_95 : f32 to vector<2x64xf32>
    %260 = arith.mulf %259, %258 : vector<2x64xf32>
    %261 = math.tanh %260 : vector<2x64xf32>
    %cst_96 = arith.constant 5.000000e-01 : f32
    %262 = vector.broadcast %cst_96 : f32 to vector<2x64xf32>
    %263 = arith.mulf %262, %261 : vector<2x64xf32>
    %cst_97 = arith.constant 5.000000e-01 : f32
    %264 = vector.broadcast %cst_97 : f32 to vector<2x64xf32>
    %265 = arith.addf %263, %264 : vector<2x64xf32>
    %266 = vector.extract_strided_slice %249 {offsets = [0, 128], sizes = [2, 64], strides = [1, 1]} : vector<2x256xf32> to vector<2x64xf32>
    %267 = math.tanh %266 : vector<2x64xf32>
    %268 = vector.extract_strided_slice %249 {offsets = [0, 192], sizes = [2, 64], strides = [1, 1]} : vector<2x256xf32> to vector<2x64xf32>
    %cst_98 = arith.constant 5.000000e-01 : f32
    %269 = vector.broadcast %cst_98 : f32 to vector<2x64xf32>
    %270 = arith.mulf %269, %268 : vector<2x64xf32>
    %271 = math.tanh %270 : vector<2x64xf32>
    %cst_99 = arith.constant 5.000000e-01 : f32
    %272 = vector.broadcast %cst_99 : f32 to vector<2x64xf32>
    %273 = arith.mulf %272, %271 : vector<2x64xf32>
    %cst_100 = arith.constant 5.000000e-01 : f32
    %274 = vector.broadcast %cst_100 : f32 to vector<2x64xf32>
    %275 = arith.addf %273, %274 : vector<2x64xf32>
    %276 = arith.mulf %265, %244 : vector<2x64xf32>
    %277 = arith.mulf %257, %267 : vector<2x64xf32>
    %278 = arith.addf %276, %277 : vector<2x64xf32>
    %279 = math.tanh %278 : vector<2x64xf32>
    %280 = arith.mulf %275, %279 : vector<2x64xf32>
    %281 = vector.extract_strided_slice %39 {offsets = [14, 0], sizes = [2, 256], strides = [1, 1]} : vector<32x256xf32> to vector<2x256xf32>
    %cst_101 = arith.constant dense<0.000000e+00> : vector<2x256xf32>
    %282 = tpu.matmul %280, %40, %cst_101 {dimension_numbers = #tpu.dot_dimension_numbers<[1], [0], [0], [1], [0, 0, 1, 1], [], []>} : vector<2x64xf32>, vector<64x256xf32>, vector<2x256xf32> -> vector<2x256xf32>
    %283 = arith.addf %281, %282 : vector<2x256xf32>
    %284 = vector.extract_strided_slice %283 {offsets = [0, 0], sizes = [2, 64], strides = [1, 1]} : vector<2x256xf32> to vector<2x64xf32>
    %cst_102 = arith.constant 5.000000e-01 : f32
    %285 = vector.broadcast %cst_102 : f32 to vector<2x64xf32>
    %286 = arith.mulf %285, %284 : vector<2x64xf32>
    %287 = math.tanh %286 : vector<2x64xf32>
    %cst_103 = arith.constant 5.000000e-01 : f32
    %288 = vector.broadcast %cst_103 : f32 to vector<2x64xf32>
    %289 = arith.mulf %288, %287 : vector<2x64xf32>
    %cst_104 = arith.constant 5.000000e-01 : f32
    %290 = vector.broadcast %cst_104 : f32 to vector<2x64xf32>
    %291 = arith.addf %289, %290 : vector<2x64xf32>
    %292 = vector.extract_strided_slice %283 {offsets = [0, 64], sizes = [2, 64], strides = [1, 1]} : vector<2x256xf32> to vector<2x64xf32>
    %cst_105 = arith.constant 5.000000e-01 : f32
    %293 = vector.broadcast %cst_105 : f32 to vector<2x64xf32>
    %294 = arith.mulf %293, %292 : vector<2x64xf32>
    %295 = math.tanh %294 : vector<2x64xf32>
    %cst_106 = arith.constant 5.000000e-01 : f32
    %296 = vector.broadcast %cst_106 : f32 to vector<2x64xf32>
    %297 = arith.mulf %296, %295 : vector<2x64xf32>
    %cst_107 = arith.constant 5.000000e-01 : f32
    %298 = vector.broadcast %cst_107 : f32 to vector<2x64xf32>
    %299 = arith.addf %297, %298 : vector<2x64xf32>
    %300 = vector.extract_strided_slice %283 {offsets = [0, 128], sizes = [2, 64], strides = [1, 1]} : vector<2x256xf32> to vector<2x64xf32>
    %301 = math.tanh %300 : vector<2x64xf32>
    %302 = vector.extract_strided_slice %283 {offsets = [0, 192], sizes = [2, 64], strides = [1, 1]} : vector<2x256xf32> to vector<2x64xf32>
    %cst_108 = arith.constant 5.000000e-01 : f32
    %303 = vector.broadcast %cst_108 : f32 to vector<2x64xf32>
    %304 = arith.mulf %303, %302 : vector<2x64xf32>
    %305 = math.tanh %304 : vector<2x64xf32>
    %cst_109 = arith.constant 5.000000e-01 : f32
    %306 = vector.broadcast %cst_109 : f32 to vector<2x64xf32>
    %307 = arith.mulf %306, %305 : vector<2x64xf32>
    %cst_110 = arith.constant 5.000000e-01 : f32
    %308 = vector.broadcast %cst_110 : f32 to vector<2x64xf32>
    %309 = arith.addf %307, %308 : vector<2x64xf32>
    %310 = arith.mulf %299, %278 : vector<2x64xf32>
    %311 = arith.mulf %291, %301 : vector<2x64xf32>
    %312 = arith.addf %310, %311 : vector<2x64xf32>
    %313 = math.tanh %312 : vector<2x64xf32>
    %314 = arith.mulf %309, %313 : vector<2x64xf32>
    %315 = vector.extract_strided_slice %39 {offsets = [16, 0], sizes = [2, 256], strides = [1, 1]} : vector<32x256xf32> to vector<2x256xf32>
    %cst_111 = arith.constant dense<0.000000e+00> : vector<2x256xf32>
    %316 = tpu.matmul %314, %40, %cst_111 {dimension_numbers = #tpu.dot_dimension_numbers<[1], [0], [0], [1], [0, 0, 1, 1], [], []>} : vector<2x64xf32>, vector<64x256xf32>, vector<2x256xf32> -> vector<2x256xf32>
    %317 = arith.addf %315, %316 : vector<2x256xf32>
    %318 = vector.extract_strided_slice %317 {offsets = [0, 0], sizes = [2, 64], strides = [1, 1]} : vector<2x256xf32> to vector<2x64xf32>
    %cst_112 = arith.constant 5.000000e-01 : f32
    %319 = vector.broadcast %cst_112 : f32 to vector<2x64xf32>
    %320 = arith.mulf %319, %318 : vector<2x64xf32>
    %321 = math.tanh %320 : vector<2x64xf32>
    %cst_113 = arith.constant 5.000000e-01 : f32
    %322 = vector.broadcast %cst_113 : f32 to vector<2x64xf32>
    %323 = arith.mulf %322, %321 : vector<2x64xf32>
    %cst_114 = arith.constant 5.000000e-01 : f32
    %324 = vector.broadcast %cst_114 : f32 to vector<2x64xf32>
    %325 = arith.addf %323, %324 : vector<2x64xf32>
    %326 = vector.extract_strided_slice %317 {offsets = [0, 64], sizes = [2, 64], strides = [1, 1]} : vector<2x256xf32> to vector<2x64xf32>
    %cst_115 = arith.constant 5.000000e-01 : f32
    %327 = vector.broadcast %cst_115 : f32 to vector<2x64xf32>
    %328 = arith.mulf %327, %326 : vector<2x64xf32>
    %329 = math.tanh %328 : vector<2x64xf32>
    %cst_116 = arith.constant 5.000000e-01 : f32
    %330 = vector.broadcast %cst_116 : f32 to vector<2x64xf32>
    %331 = arith.mulf %330, %329 : vector<2x64xf32>
    %cst_117 = arith.constant 5.000000e-01 : f32
    %332 = vector.broadcast %cst_117 : f32 to vector<2x64xf32>
    %333 = arith.addf %331, %332 : vector<2x64xf32>
    %334 = vector.extract_strided_slice %317 {offsets = [0, 128], sizes = [2, 64], strides = [1, 1]} : vector<2x256xf32> to vector<2x64xf32>
    %335 = math.tanh %334 : vector<2x64xf32>
    %336 = vector.extract_strided_slice %317 {offsets = [0, 192], sizes = [2, 64], strides = [1, 1]} : vector<2x256xf32> to vector<2x64xf32>
    %cst_118 = arith.constant 5.000000e-01 : f32
    %337 = vector.broadcast %cst_118 : f32 to vector<2x64xf32>
    %338 = arith.mulf %337, %336 : vector<2x64xf32>
    %339 = math.tanh %338 : vector<2x64xf32>
    %cst_119 = arith.constant 5.000000e-01 : f32
    %340 = vector.broadcast %cst_119 : f32 to vector<2x64xf32>
    %341 = arith.mulf %340, %339 : vector<2x64xf32>
    %cst_120 = arith.constant 5.000000e-01 : f32
    %342 = vector.broadcast %cst_120 : f32 to vector<2x64xf32>
    %343 = arith.addf %341, %342 : vector<2x64xf32>
    %344 = arith.mulf %333, %312 : vector<2x64xf32>
    %345 = arith.mulf %325, %335 : vector<2x64xf32>
    %346 = arith.addf %344, %345 : vector<2x64xf32>
    %347 = math.tanh %346 : vector<2x64xf32>
    %348 = arith.mulf %343, %347 : vector<2x64xf32>
    %349 = vector.extract_strided_slice %39 {offsets = [18, 0], sizes = [2, 256], strides = [1, 1]} : vector<32x256xf32> to vector<2x256xf32>
    %cst_121 = arith.constant dense<0.000000e+00> : vector<2x256xf32>
    %350 = tpu.matmul %348, %40, %cst_121 {dimension_numbers = #tpu.dot_dimension_numbers<[1], [0], [0], [1], [0, 0, 1, 1], [], []>} : vector<2x64xf32>, vector<64x256xf32>, vector<2x256xf32> -> vector<2x256xf32>
    %351 = arith.addf %349, %350 : vector<2x256xf32>
    %352 = vector.extract_strided_slice %351 {offsets = [0, 0], sizes = [2, 64], strides = [1, 1]} : vector<2x256xf32> to vector<2x64xf32>
    %cst_122 = arith.constant 5.000000e-01 : f32
    %353 = vector.broadcast %cst_122 : f32 to vector<2x64xf32>
    %354 = arith.mulf %353, %352 : vector<2x64xf32>
    %355 = math.tanh %354 : vector<2x64xf32>
    %cst_123 = arith.constant 5.000000e-01 : f32
    %356 = vector.broadcast %cst_123 : f32 to vector<2x64xf32>
    %357 = arith.mulf %356, %355 : vector<2x64xf32>
    %cst_124 = arith.constant 5.000000e-01 : f32
    %358 = vector.broadcast %cst_124 : f32 to vector<2x64xf32>
    %359 = arith.addf %357, %358 : vector<2x64xf32>
    %360 = vector.extract_strided_slice %351 {offsets = [0, 64], sizes = [2, 64], strides = [1, 1]} : vector<2x256xf32> to vector<2x64xf32>
    %cst_125 = arith.constant 5.000000e-01 : f32
    %361 = vector.broadcast %cst_125 : f32 to vector<2x64xf32>
    %362 = arith.mulf %361, %360 : vector<2x64xf32>
    %363 = math.tanh %362 : vector<2x64xf32>
    %cst_126 = arith.constant 5.000000e-01 : f32
    %364 = vector.broadcast %cst_126 : f32 to vector<2x64xf32>
    %365 = arith.mulf %364, %363 : vector<2x64xf32>
    %cst_127 = arith.constant 5.000000e-01 : f32
    %366 = vector.broadcast %cst_127 : f32 to vector<2x64xf32>
    %367 = arith.addf %365, %366 : vector<2x64xf32>
    %368 = vector.extract_strided_slice %351 {offsets = [0, 128], sizes = [2, 64], strides = [1, 1]} : vector<2x256xf32> to vector<2x64xf32>
    %369 = math.tanh %368 : vector<2x64xf32>
    %370 = vector.extract_strided_slice %351 {offsets = [0, 192], sizes = [2, 64], strides = [1, 1]} : vector<2x256xf32> to vector<2x64xf32>
    %cst_128 = arith.constant 5.000000e-01 : f32
    %371 = vector.broadcast %cst_128 : f32 to vector<2x64xf32>
    %372 = arith.mulf %371, %370 : vector<2x64xf32>
    %373 = math.tanh %372 : vector<2x64xf32>
    %cst_129 = arith.constant 5.000000e-01 : f32
    %374 = vector.broadcast %cst_129 : f32 to vector<2x64xf32>
    %375 = arith.mulf %374, %373 : vector<2x64xf32>
    %cst_130 = arith.constant 5.000000e-01 : f32
    %376 = vector.broadcast %cst_130 : f32 to vector<2x64xf32>
    %377 = arith.addf %375, %376 : vector<2x64xf32>
    %378 = arith.mulf %367, %346 : vector<2x64xf32>
    %379 = arith.mulf %359, %369 : vector<2x64xf32>
    %380 = arith.addf %378, %379 : vector<2x64xf32>
    %381 = math.tanh %380 : vector<2x64xf32>
    %382 = arith.mulf %377, %381 : vector<2x64xf32>
    %383 = vector.extract_strided_slice %39 {offsets = [20, 0], sizes = [2, 256], strides = [1, 1]} : vector<32x256xf32> to vector<2x256xf32>
    %cst_131 = arith.constant dense<0.000000e+00> : vector<2x256xf32>
    %384 = tpu.matmul %382, %40, %cst_131 {dimension_numbers = #tpu.dot_dimension_numbers<[1], [0], [0], [1], [0, 0, 1, 1], [], []>} : vector<2x64xf32>, vector<64x256xf32>, vector<2x256xf32> -> vector<2x256xf32>
    %385 = arith.addf %383, %384 : vector<2x256xf32>
    %386 = vector.extract_strided_slice %385 {offsets = [0, 0], sizes = [2, 64], strides = [1, 1]} : vector<2x256xf32> to vector<2x64xf32>
    %cst_132 = arith.constant 5.000000e-01 : f32
    %387 = vector.broadcast %cst_132 : f32 to vector<2x64xf32>
    %388 = arith.mulf %387, %386 : vector<2x64xf32>
    %389 = math.tanh %388 : vector<2x64xf32>
    %cst_133 = arith.constant 5.000000e-01 : f32
    %390 = vector.broadcast %cst_133 : f32 to vector<2x64xf32>
    %391 = arith.mulf %390, %389 : vector<2x64xf32>
    %cst_134 = arith.constant 5.000000e-01 : f32
    %392 = vector.broadcast %cst_134 : f32 to vector<2x64xf32>
    %393 = arith.addf %391, %392 : vector<2x64xf32>
    %394 = vector.extract_strided_slice %385 {offsets = [0, 64], sizes = [2, 64], strides = [1, 1]} : vector<2x256xf32> to vector<2x64xf32>
    %cst_135 = arith.constant 5.000000e-01 : f32
    %395 = vector.broadcast %cst_135 : f32 to vector<2x64xf32>
    %396 = arith.mulf %395, %394 : vector<2x64xf32>
    %397 = math.tanh %396 : vector<2x64xf32>
    %cst_136 = arith.constant 5.000000e-01 : f32
    %398 = vector.broadcast %cst_136 : f32 to vector<2x64xf32>
    %399 = arith.mulf %398, %397 : vector<2x64xf32>
    %cst_137 = arith.constant 5.000000e-01 : f32
    %400 = vector.broadcast %cst_137 : f32 to vector<2x64xf32>
    %401 = arith.addf %399, %400 : vector<2x64xf32>
    %402 = vector.extract_strided_slice %385 {offsets = [0, 128], sizes = [2, 64], strides = [1, 1]} : vector<2x256xf32> to vector<2x64xf32>
    %403 = math.tanh %402 : vector<2x64xf32>
    %404 = vector.extract_strided_slice %385 {offsets = [0, 192], sizes = [2, 64], strides = [1, 1]} : vector<2x256xf32> to vector<2x64xf32>
    %cst_138 = arith.constant 5.000000e-01 : f32
    %405 = vector.broadcast %cst_138 : f32 to vector<2x64xf32>
    %406 = arith.mulf %405, %404 : vector<2x64xf32>
    %407 = math.tanh %406 : vector<2x64xf32>
    %cst_139 = arith.constant 5.000000e-01 : f32
    %408 = vector.broadcast %cst_139 : f32 to vector<2x64xf32>
    %409 = arith.mulf %408, %407 : vector<2x64xf32>
    %cst_140 = arith.constant 5.000000e-01 : f32
    %410 = vector.broadcast %cst_140 : f32 to vector<2x64xf32>
    %411 = arith.addf %409, %410 : vector<2x64xf32>
    %412 = arith.mulf %401, %380 : vector<2x64xf32>
    %413 = arith.mulf %393, %403 : vector<2x64xf32>
    %414 = arith.addf %412, %413 : vector<2x64xf32>
    %415 = math.tanh %414 : vector<2x64xf32>
    %416 = arith.mulf %411, %415 : vector<2x64xf32>
    %417 = vector.extract_strided_slice %39 {offsets = [22, 0], sizes = [2, 256], strides = [1, 1]} : vector<32x256xf32> to vector<2x256xf32>
    %cst_141 = arith.constant dense<0.000000e+00> : vector<2x256xf32>
    %418 = tpu.matmul %416, %40, %cst_141 {dimension_numbers = #tpu.dot_dimension_numbers<[1], [0], [0], [1], [0, 0, 1, 1], [], []>} : vector<2x64xf32>, vector<64x256xf32>, vector<2x256xf32> -> vector<2x256xf32>
    %419 = arith.addf %417, %418 : vector<2x256xf32>
    %420 = vector.extract_strided_slice %419 {offsets = [0, 0], sizes = [2, 64], strides = [1, 1]} : vector<2x256xf32> to vector<2x64xf32>
    %cst_142 = arith.constant 5.000000e-01 : f32
    %421 = vector.broadcast %cst_142 : f32 to vector<2x64xf32>
    %422 = arith.mulf %421, %420 : vector<2x64xf32>
    %423 = math.tanh %422 : vector<2x64xf32>
    %cst_143 = arith.constant 5.000000e-01 : f32
    %424 = vector.broadcast %cst_143 : f32 to vector<2x64xf32>
    %425 = arith.mulf %424, %423 : vector<2x64xf32>
    %cst_144 = arith.constant 5.000000e-01 : f32
    %426 = vector.broadcast %cst_144 : f32 to vector<2x64xf32>
    %427 = arith.addf %425, %426 : vector<2x64xf32>
    %428 = vector.extract_strided_slice %419 {offsets = [0, 64], sizes = [2, 64], strides = [1, 1]} : vector<2x256xf32> to vector<2x64xf32>
    %cst_145 = arith.constant 5.000000e-01 : f32
    %429 = vector.broadcast %cst_145 : f32 to vector<2x64xf32>
    %430 = arith.mulf %429, %428 : vector<2x64xf32>
    %431 = math.tanh %430 : vector<2x64xf32>
    %cst_146 = arith.constant 5.000000e-01 : f32
    %432 = vector.broadcast %cst_146 : f32 to vector<2x64xf32>
    %433 = arith.mulf %432, %431 : vector<2x64xf32>
    %cst_147 = arith.constant 5.000000e-01 : f32
    %434 = vector.broadcast %cst_147 : f32 to vector<2x64xf32>
    %435 = arith.addf %433, %434 : vector<2x64xf32>
    %436 = vector.extract_strided_slice %419 {offsets = [0, 128], sizes = [2, 64], strides = [1, 1]} : vector<2x256xf32> to vector<2x64xf32>
    %437 = math.tanh %436 : vector<2x64xf32>
    %438 = vector.extract_strided_slice %419 {offsets = [0, 192], sizes = [2, 64], strides = [1, 1]} : vector<2x256xf32> to vector<2x64xf32>
    %cst_148 = arith.constant 5.000000e-01 : f32
    %439 = vector.broadcast %cst_148 : f32 to vector<2x64xf32>
    %440 = arith.mulf %439, %438 : vector<2x64xf32>
    %441 = math.tanh %440 : vector<2x64xf32>
    %cst_149 = arith.constant 5.000000e-01 : f32
    %442 = vector.broadcast %cst_149 : f32 to vector<2x64xf32>
    %443 = arith.mulf %442, %441 : vector<2x64xf32>
    %cst_150 = arith.constant 5.000000e-01 : f32
    %444 = vector.broadcast %cst_150 : f32 to vector<2x64xf32>
    %445 = arith.addf %443, %444 : vector<2x64xf32>
    %446 = arith.mulf %435, %414 : vector<2x64xf32>
    %447 = arith.mulf %427, %437 : vector<2x64xf32>
    %448 = arith.addf %446, %447 : vector<2x64xf32>
    %449 = math.tanh %448 : vector<2x64xf32>
    %450 = arith.mulf %445, %449 : vector<2x64xf32>
    %451 = vector.extract_strided_slice %39 {offsets = [24, 0], sizes = [2, 256], strides = [1, 1]} : vector<32x256xf32> to vector<2x256xf32>
    %cst_151 = arith.constant dense<0.000000e+00> : vector<2x256xf32>
    %452 = tpu.matmul %450, %40, %cst_151 {dimension_numbers = #tpu.dot_dimension_numbers<[1], [0], [0], [1], [0, 0, 1, 1], [], []>} : vector<2x64xf32>, vector<64x256xf32>, vector<2x256xf32> -> vector<2x256xf32>
    %453 = arith.addf %451, %452 : vector<2x256xf32>
    %454 = vector.extract_strided_slice %453 {offsets = [0, 0], sizes = [2, 64], strides = [1, 1]} : vector<2x256xf32> to vector<2x64xf32>
    %cst_152 = arith.constant 5.000000e-01 : f32
    %455 = vector.broadcast %cst_152 : f32 to vector<2x64xf32>
    %456 = arith.mulf %455, %454 : vector<2x64xf32>
    %457 = math.tanh %456 : vector<2x64xf32>
    %cst_153 = arith.constant 5.000000e-01 : f32
    %458 = vector.broadcast %cst_153 : f32 to vector<2x64xf32>
    %459 = arith.mulf %458, %457 : vector<2x64xf32>
    %cst_154 = arith.constant 5.000000e-01 : f32
    %460 = vector.broadcast %cst_154 : f32 to vector<2x64xf32>
    %461 = arith.addf %459, %460 : vector<2x64xf32>
    %462 = vector.extract_strided_slice %453 {offsets = [0, 64], sizes = [2, 64], strides = [1, 1]} : vector<2x256xf32> to vector<2x64xf32>
    %cst_155 = arith.constant 5.000000e-01 : f32
    %463 = vector.broadcast %cst_155 : f32 to vector<2x64xf32>
    %464 = arith.mulf %463, %462 : vector<2x64xf32>
    %465 = math.tanh %464 : vector<2x64xf32>
    %cst_156 = arith.constant 5.000000e-01 : f32
    %466 = vector.broadcast %cst_156 : f32 to vector<2x64xf32>
    %467 = arith.mulf %466, %465 : vector<2x64xf32>
    %cst_157 = arith.constant 5.000000e-01 : f32
    %468 = vector.broadcast %cst_157 : f32 to vector<2x64xf32>
    %469 = arith.addf %467, %468 : vector<2x64xf32>
    %470 = vector.extract_strided_slice %453 {offsets = [0, 128], sizes = [2, 64], strides = [1, 1]} : vector<2x256xf32> to vector<2x64xf32>
    %471 = math.tanh %470 : vector<2x64xf32>
    %472 = vector.extract_strided_slice %453 {offsets = [0, 192], sizes = [2, 64], strides = [1, 1]} : vector<2x256xf32> to vector<2x64xf32>
    %cst_158 = arith.constant 5.000000e-01 : f32
    %473 = vector.broadcast %cst_158 : f32 to vector<2x64xf32>
    %474 = arith.mulf %473, %472 : vector<2x64xf32>
    %475 = math.tanh %474 : vector<2x64xf32>
    %cst_159 = arith.constant 5.000000e-01 : f32
    %476 = vector.broadcast %cst_159 : f32 to vector<2x64xf32>
    %477 = arith.mulf %476, %475 : vector<2x64xf32>
    %cst_160 = arith.constant 5.000000e-01 : f32
    %478 = vector.broadcast %cst_160 : f32 to vector<2x64xf32>
    %479 = arith.addf %477, %478 : vector<2x64xf32>
    %480 = arith.mulf %469, %448 : vector<2x64xf32>
    %481 = arith.mulf %461, %471 : vector<2x64xf32>
    %482 = arith.addf %480, %481 : vector<2x64xf32>
    %483 = math.tanh %482 : vector<2x64xf32>
    %484 = arith.mulf %479, %483 : vector<2x64xf32>
    %485 = vector.extract_strided_slice %39 {offsets = [26, 0], sizes = [2, 256], strides = [1, 1]} : vector<32x256xf32> to vector<2x256xf32>
    %cst_161 = arith.constant dense<0.000000e+00> : vector<2x256xf32>
    %486 = tpu.matmul %484, %40, %cst_161 {dimension_numbers = #tpu.dot_dimension_numbers<[1], [0], [0], [1], [0, 0, 1, 1], [], []>} : vector<2x64xf32>, vector<64x256xf32>, vector<2x256xf32> -> vector<2x256xf32>
    %487 = arith.addf %485, %486 : vector<2x256xf32>
    %488 = vector.extract_strided_slice %487 {offsets = [0, 0], sizes = [2, 64], strides = [1, 1]} : vector<2x256xf32> to vector<2x64xf32>
    %cst_162 = arith.constant 5.000000e-01 : f32
    %489 = vector.broadcast %cst_162 : f32 to vector<2x64xf32>
    %490 = arith.mulf %489, %488 : vector<2x64xf32>
    %491 = math.tanh %490 : vector<2x64xf32>
    %cst_163 = arith.constant 5.000000e-01 : f32
    %492 = vector.broadcast %cst_163 : f32 to vector<2x64xf32>
    %493 = arith.mulf %492, %491 : vector<2x64xf32>
    %cst_164 = arith.constant 5.000000e-01 : f32
    %494 = vector.broadcast %cst_164 : f32 to vector<2x64xf32>
    %495 = arith.addf %493, %494 : vector<2x64xf32>
    %496 = vector.extract_strided_slice %487 {offsets = [0, 64], sizes = [2, 64], strides = [1, 1]} : vector<2x256xf32> to vector<2x64xf32>
    %cst_165 = arith.constant 5.000000e-01 : f32
    %497 = vector.broadcast %cst_165 : f32 to vector<2x64xf32>
    %498 = arith.mulf %497, %496 : vector<2x64xf32>
    %499 = math.tanh %498 : vector<2x64xf32>
    %cst_166 = arith.constant 5.000000e-01 : f32
    %500 = vector.broadcast %cst_166 : f32 to vector<2x64xf32>
    %501 = arith.mulf %500, %499 : vector<2x64xf32>
    %cst_167 = arith.constant 5.000000e-01 : f32
    %502 = vector.broadcast %cst_167 : f32 to vector<2x64xf32>
    %503 = arith.addf %501, %502 : vector<2x64xf32>
    %504 = vector.extract_strided_slice %487 {offsets = [0, 128], sizes = [2, 64], strides = [1, 1]} : vector<2x256xf32> to vector<2x64xf32>
    %505 = math.tanh %504 : vector<2x64xf32>
    %506 = vector.extract_strided_slice %487 {offsets = [0, 192], sizes = [2, 64], strides = [1, 1]} : vector<2x256xf32> to vector<2x64xf32>
    %cst_168 = arith.constant 5.000000e-01 : f32
    %507 = vector.broadcast %cst_168 : f32 to vector<2x64xf32>
    %508 = arith.mulf %507, %506 : vector<2x64xf32>
    %509 = math.tanh %508 : vector<2x64xf32>
    %cst_169 = arith.constant 5.000000e-01 : f32
    %510 = vector.broadcast %cst_169 : f32 to vector<2x64xf32>
    %511 = arith.mulf %510, %509 : vector<2x64xf32>
    %cst_170 = arith.constant 5.000000e-01 : f32
    %512 = vector.broadcast %cst_170 : f32 to vector<2x64xf32>
    %513 = arith.addf %511, %512 : vector<2x64xf32>
    %514 = arith.mulf %503, %482 : vector<2x64xf32>
    %515 = arith.mulf %495, %505 : vector<2x64xf32>
    %516 = arith.addf %514, %515 : vector<2x64xf32>
    %517 = math.tanh %516 : vector<2x64xf32>
    %518 = arith.mulf %513, %517 : vector<2x64xf32>
    %519 = vector.extract_strided_slice %39 {offsets = [28, 0], sizes = [2, 256], strides = [1, 1]} : vector<32x256xf32> to vector<2x256xf32>
    %cst_171 = arith.constant dense<0.000000e+00> : vector<2x256xf32>
    %520 = tpu.matmul %518, %40, %cst_171 {dimension_numbers = #tpu.dot_dimension_numbers<[1], [0], [0], [1], [0, 0, 1, 1], [], []>} : vector<2x64xf32>, vector<64x256xf32>, vector<2x256xf32> -> vector<2x256xf32>
    %521 = arith.addf %519, %520 : vector<2x256xf32>
    %522 = vector.extract_strided_slice %521 {offsets = [0, 0], sizes = [2, 64], strides = [1, 1]} : vector<2x256xf32> to vector<2x64xf32>
    %cst_172 = arith.constant 5.000000e-01 : f32
    %523 = vector.broadcast %cst_172 : f32 to vector<2x64xf32>
    %524 = arith.mulf %523, %522 : vector<2x64xf32>
    %525 = math.tanh %524 : vector<2x64xf32>
    %cst_173 = arith.constant 5.000000e-01 : f32
    %526 = vector.broadcast %cst_173 : f32 to vector<2x64xf32>
    %527 = arith.mulf %526, %525 : vector<2x64xf32>
    %cst_174 = arith.constant 5.000000e-01 : f32
    %528 = vector.broadcast %cst_174 : f32 to vector<2x64xf32>
    %529 = arith.addf %527, %528 : vector<2x64xf32>
    %530 = vector.extract_strided_slice %521 {offsets = [0, 64], sizes = [2, 64], strides = [1, 1]} : vector<2x256xf32> to vector<2x64xf32>
    %cst_175 = arith.constant 5.000000e-01 : f32
    %531 = vector.broadcast %cst_175 : f32 to vector<2x64xf32>
    %532 = arith.mulf %531, %530 : vector<2x64xf32>
    %533 = math.tanh %532 : vector<2x64xf32>
    %cst_176 = arith.constant 5.000000e-01 : f32
    %534 = vector.broadcast %cst_176 : f32 to vector<2x64xf32>
    %535 = arith.mulf %534, %533 : vector<2x64xf32>
    %cst_177 = arith.constant 5.000000e-01 : f32
    %536 = vector.broadcast %cst_177 : f32 to vector<2x64xf32>
    %537 = arith.addf %535, %536 : vector<2x64xf32>
    %538 = vector.extract_strided_slice %521 {offsets = [0, 128], sizes = [2, 64], strides = [1, 1]} : vector<2x256xf32> to vector<2x64xf32>
    %539 = math.tanh %538 : vector<2x64xf32>
    %540 = vector.extract_strided_slice %521 {offsets = [0, 192], sizes = [2, 64], strides = [1, 1]} : vector<2x256xf32> to vector<2x64xf32>
    %cst_178 = arith.constant 5.000000e-01 : f32
    %541 = vector.broadcast %cst_178 : f32 to vector<2x64xf32>
    %542 = arith.mulf %541, %540 : vector<2x64xf32>
    %543 = math.tanh %542 : vector<2x64xf32>
    %cst_179 = arith.constant 5.000000e-01 : f32
    %544 = vector.broadcast %cst_179 : f32 to vector<2x64xf32>
    %545 = arith.mulf %544, %543 : vector<2x64xf32>
    %cst_180 = arith.constant 5.000000e-01 : f32
    %546 = vector.broadcast %cst_180 : f32 to vector<2x64xf32>
    %547 = arith.addf %545, %546 : vector<2x64xf32>
    %548 = arith.mulf %537, %516 : vector<2x64xf32>
    %549 = arith.mulf %529, %539 : vector<2x64xf32>
    %550 = arith.addf %548, %549 : vector<2x64xf32>
    %551 = math.tanh %550 : vector<2x64xf32>
    %552 = arith.mulf %547, %551 : vector<2x64xf32>
    %553 = vector.extract_strided_slice %39 {offsets = [30, 0], sizes = [2, 256], strides = [1, 1]} : vector<32x256xf32> to vector<2x256xf32>
    %cst_181 = arith.constant dense<0.000000e+00> : vector<2x256xf32>
    %554 = tpu.matmul %552, %40, %cst_181 {dimension_numbers = #tpu.dot_dimension_numbers<[1], [0], [0], [1], [0, 0, 1, 1], [], []>} : vector<2x64xf32>, vector<64x256xf32>, vector<2x256xf32> -> vector<2x256xf32>
    %555 = arith.addf %553, %554 : vector<2x256xf32>
    %556 = vector.extract_strided_slice %555 {offsets = [0, 0], sizes = [2, 64], strides = [1, 1]} : vector<2x256xf32> to vector<2x64xf32>
    %cst_182 = arith.constant 5.000000e-01 : f32
    %557 = vector.broadcast %cst_182 : f32 to vector<2x64xf32>
    %558 = arith.mulf %557, %556 : vector<2x64xf32>
    %559 = math.tanh %558 : vector<2x64xf32>
    %cst_183 = arith.constant 5.000000e-01 : f32
    %560 = vector.broadcast %cst_183 : f32 to vector<2x64xf32>
    %561 = arith.mulf %560, %559 : vector<2x64xf32>
    %cst_184 = arith.constant 5.000000e-01 : f32
    %562 = vector.broadcast %cst_184 : f32 to vector<2x64xf32>
    %563 = arith.addf %561, %562 : vector<2x64xf32>
    %564 = vector.extract_strided_slice %555 {offsets = [0, 64], sizes = [2, 64], strides = [1, 1]} : vector<2x256xf32> to vector<2x64xf32>
    %cst_185 = arith.constant 5.000000e-01 : f32
    %565 = vector.broadcast %cst_185 : f32 to vector<2x64xf32>
    %566 = arith.mulf %565, %564 : vector<2x64xf32>
    %567 = math.tanh %566 : vector<2x64xf32>
    %cst_186 = arith.constant 5.000000e-01 : f32
    %568 = vector.broadcast %cst_186 : f32 to vector<2x64xf32>
    %569 = arith.mulf %568, %567 : vector<2x64xf32>
    %cst_187 = arith.constant 5.000000e-01 : f32
    %570 = vector.broadcast %cst_187 : f32 to vector<2x64xf32>
    %571 = arith.addf %569, %570 : vector<2x64xf32>
    %572 = vector.extract_strided_slice %555 {offsets = [0, 128], sizes = [2, 64], strides = [1, 1]} : vector<2x256xf32> to vector<2x64xf32>
    %573 = math.tanh %572 : vector<2x64xf32>
    %574 = vector.extract_strided_slice %555 {offsets = [0, 192], sizes = [2, 64], strides = [1, 1]} : vector<2x256xf32> to vector<2x64xf32>
    %cst_188 = arith.constant 5.000000e-01 : f32
    %575 = vector.broadcast %cst_188 : f32 to vector<2x64xf32>
    %576 = arith.mulf %575, %574 : vector<2x64xf32>
    %577 = math.tanh %576 : vector<2x64xf32>
    %cst_189 = arith.constant 5.000000e-01 : f32
    %578 = vector.broadcast %cst_189 : f32 to vector<2x64xf32>
    %579 = arith.mulf %578, %577 : vector<2x64xf32>
    %cst_190 = arith.constant 5.000000e-01 : f32
    %580 = vector.broadcast %cst_190 : f32 to vector<2x64xf32>
    %581 = arith.addf %579, %580 : vector<2x64xf32>
    %582 = arith.mulf %571, %550 : vector<2x64xf32>
    %583 = arith.mulf %563, %573 : vector<2x64xf32>
    %584 = arith.addf %582, %583 : vector<2x64xf32>
    %585 = math.tanh %584 : vector<2x64xf32>
    %586 = arith.mulf %581, %585 : vector<2x64xf32>
    %c0_191 = arith.constant 0 : index
    %c0_192 = arith.constant 0 : index
    %587 = vector.load %arg3[%c0_191, %c0_192] : memref<65x2xf32, #tpu.memory_space<vmem>>, vector<64x2xf32>
    %cst_193 = arith.constant dense<0.000000e+00> : vector<2x2xf32>
    %588 = tpu.matmul %586, %587, %cst_193 {dimension_numbers = #tpu.dot_dimension_numbers<[1], [0], [0], [1], [0, 0, 1, 1], [], []>} : vector<2x64xf32>, vector<64x2xf32>, vector<2x2xf32> -> vector<2x2xf32>
    %c64 = arith.constant 64 : index
    %c0_194 = arith.constant 0 : index
    %589 = vector.load %arg3[%c64, %c0_194] : memref<65x2xf32, #tpu.memory_space<vmem>>, vector<1x2xf32>
    %590 = vector.broadcast %589 : vector<1x2xf32> to vector<2x2xf32>
    %591 = arith.addf %588, %590 : vector<2x2xf32>
    %c0_195 = arith.constant 0 : index
    %c0_196 = arith.constant 0 : index
    %592 = vector.load %arg4[%c0_195, %c0_196] : memref<2x2xf32, #tpu.memory_space<vmem>>, vector<2x2xf32>
    tpu.vector_store %arg4[%c0_195, %c0_196], %591 {strides = array<i32>} : memref<2x2xf32, #tpu.memory_space<vmem>>, vector<2x2xf32>,
    return
  }
}

</mosaic_0001>

<llo_original>
// kernel: cnn_lstm_forward.1
$region0: #{cnn_lstm_forward.1}
  #allocation0 [shape = 'u32[]', space=smem, size = 0x4, offset = 0x4, fixed_abs, tag = 'smem constant byte address 0x4 - core index']
  #allocation1 [shape = 'u32[72,128]{1,0:T(1,128)}', space=vmem, size = 0x9000, scoped, tag = 'internal scratch']
  #allocation2 [shape = 'f32[48,32]{1,0:T(8,128)}', space=vmem, size = 0x6000, scoped, tag = 'scratch operand']
  %s0 = inlined_call_operand.vmem [shape: f32[32,10], index: 0, kind: input, shape index: {}]
  %s1 = inlined_call_operand.vmem [shape: f32[112,64], index: 1, kind: input, shape index: {}]
  %s2 = inlined_call_operand.vmem [shape: f32[97,256], index: 2, kind: input, shape index: {}]
  %s3 = inlined_call_operand.vmem [shape: f32[65,2], index: 3, kind: input, shape index: {}]
  %s4 = inlined_call_operand.hbm [shape: f32[2,2], index: 4, kind: output, shape index: {}]
  %s5 = sld [smem:[#allocation0]]
  $region26: #{cnn_lstm_forward.1} parent=0
    _
  %s7 = ssub.s32 1, %s5
  %s8 = scalar_select 0, %s7, %s5
  $region1: #{cnn_lstm_forward.1} parent=0
    #allocation3 [shape = 'u8[1024]{0}', space=vmem, size = 0x400, scoped, tag = 'output window, operand 0, single buffered']
    #allocation4 [shape = 's32[1]{0}', space=sflag, size = 0x4, scoped, tag = 'scoped memory for cnn_lstm_forward.1']
    %9 = vsyncpa [#allocation4], 0
    // Predicated region
    $region2: #{cnn_lstm_forward.1} parent=1 // pred_check
      _
    $region3: #{cnn_lstm_forward.1} parent=1 // pred_check_branch
      %11 = sbr.rel (0) target = $region5
    $region4: #{cnn_lstm_forward.1} parent=1 // pred_region
      _
    $region5: #{cnn_lstm_forward.1} parent=1 // pred_fallthru
      _
    // Predicated region
    $region6: #{cnn_lstm_forward.1} parent=1 // pred_check
      _
    $region7: #{cnn_lstm_forward.1} parent=1 // pred_check_branch
      %13 = sbr.rel (0) target = $region9
    $region8: #{cnn_lstm_forward.1} parent=1 // pred_region
      _
    $region9: #{cnn_lstm_forward.1} parent=1 // pred_fallthru
      _
    // Predicated region
    $region10: #{cnn_lstm_forward.1} parent=1 // pred_check
      _
    $region11: #{cnn_lstm_forward.1} parent=1 // pred_check_branch
      %15 = sbr.rel (0) target = $region13
    $region12: #{cnn_lstm_forward.1} parent=1 // pred_region
      _
    $region13: #{cnn_lstm_forward.1} parent=1 // pred_fallthru
      _
    // Predicated region
    $region14: #{cnn_lstm_forward.1} parent=1 // pred_check
      _
    $region15: #{cnn_lstm_forward.1} parent=1 // pred_check_branch
      %17 = sbr.rel (0) target = $region17
    $region16: #{cnn_lstm_forward.1} parent=1 // pred_region
      _
    $region17: #{cnn_lstm_forward.1} parent=1 // pred_fallthru
      _
    %v18 = vld [vmem:[%s1] sm:$0xff]
    %v19 = vld [vmem:[%s1 + $0x8] sm:$0x3]
    %v20 = vld [vmem:[%s1 + $0xa] sm:$0x1]
    %v21 = vld [vmem:[%s0] sm:$0xff]
    %v22 = vld [vmem:[%s0 + $0x8] sm:$0xff]
    %v23 = vld [vmem:[%s0 + $0x10] sm:$0xff]
    %v24 = vld [vmem:[%s0 + $0x18] sm:$0xff]
    %v25 = vperm.slane %v20, 0
    %vm26 = vcmask 80896
    %v28 = vsel %vm26, %v21, 0
    %v31 = vsel %vm26, %v22, 0
    %v34 = vsel %vm26, %v23, 0
    %v37 = vsel %vm26, %v24, 0
    %vm39 = vcmask 1041408
    %v41 = vsel %vm39, %v19, 0
    %43 = vmatpush.msra.mxu0 0.0
    %44 = vmatpush.msra.mxu0 0.0
    %45 = vmatpush.msra.mxu0 0.0
    %46 = vmatpush.msra.mxu0 0.0
    %47 = vmatpush.msra.mxu0 0.0
    %48 = vmatpush.msra.mxu0 0.0
    %49 = vmatpush.msra.mxu0 0.0
    %50 = vmatpush.msra.mxu0 0.0
    %51 = vmatpush.msra.mxu0 0.0
    %52 = vmatpush.msra.mxu0 0.0
    %53 = vmatpush.msra.mxu0 0.0
    %54 = vmatpush.msra.mxu0 0.0
    %55 = vmatpush.msra.mxu0 0.0
    %56 = vmatpush.msra.mxu0 0.0
    %57 = vmatpush.msra.mxu0 %v41
    %58 = vmatpush.msra.mxu0 %v18
    %59 = vmatmul.f32.gmra.mxu0 %v28
    %v60 = vpop.f32.mrf.mxu0
    %v61 = vadd.f32 %v25, %v60
    %62 = vmatmul.f32.gmra.mxu0 %v31
    %v63 = vpop.f32.mrf.mxu0
    %v64 = vadd.f32 %v25, %v63
    %65 = vmatmul.f32.gmra.mxu0 %v34
    %v66 = vpop.f32.mrf.mxu0
    %v67 = vadd.f32 %v25, %v66
    %68 = vmatmul.f32.gmra.mxu0 %v37
    %v69 = vpop.f32.mrf.mxu0
    %v70 = vadd.f32 %v25, %v69
    %71 = vdwg.mxu0
    %76 = vrot.lane.b32.xlu0 %v61, 96
    %v77 = vpop.permute.xlu0 %76
    %78 = vrot.lane.b32.xlu0 %v64, 96
    %v79 = vpop.permute.xlu0 %78
    %80 = vrot.lane.b32.xlu0 %v67, 96
    %v81 = vpop.permute.xlu0 %80
    %82 = vrot.lane.b32.xlu0 %v70, 96
    %v83 = vpop.permute.xlu0 %82
    %v88 = vmax.f32 %v61, %v77
    %v89 = vmax.f32 %v64, %v79
    %v90 = vmax.f32 %v67, %v81
    %v91 = vmax.f32 %v70, %v83
    %v92 = vmax.f32 %v88, 0.0
    %v93 = vmax.f32 %v89, 0.0
    %v94 = vmax.f32 %v90, 0.0
    %v95 = vmax.f32 %v91, 0.0
    %vm96 = vcmask 261120
    %97 = vst.msk [vmem:[#allocation2 + $0x8] sm:$0xff] %vm96, %v92
    %98 = vst.msk [vmem:[#allocation2 + $0x10] sm:$0xff] %vm96, %v93
    %99 = vst.msk [vmem:[#allocation2 + $0x18] sm:$0xff] %vm96, %v94
    %100 = vst.msk [vmem:[#allocation2 + $0x20] sm:$0xff] %vm96, %v95
    %vm101 = vcmask 254976
    %102 = vst.msk [vmem:[#allocation2 + $0x6] sm:$0x3] %vm101, 0.0
    %103 = vst.msk [vmem:[#allocation2 + $0x28] sm:$0x3] %vm101, 0.0
    %v104 = vld [vmem:[%s1 + $0xb] sm:$0x1]
    %v105 = vld [vmem:[#allocation2 + $0x6] sm:$0xff]
    %v106 = vld [vmem:[#allocation2 + $0xe] sm:$0xff]
    %v107 = vld [vmem:[#allocation2 + $0x16] sm:$0xff]
    %v108 = vld [vmem:[#allocation2 + $0x1e] sm:$0xff]
    %v109 = vld [vmem:[%s1 + $0x10] sm:$0xff]
    %v110 = vld [vmem:[%s1 + $0x18] sm:$0xff]
    %v111 = vld [vmem:[%s1 + $0x20] sm:$0xff]
    %v112 = vld [vmem:[%s1 + $0x28] sm:$0xff]
    %v113 = vld [vmem:[#allocation2 + $0x8] sm:$0xff]
    %v114 = vld [vmem:[#allocation2 + $0x10] sm:$0xff]
    %v115 = vld [vmem:[#allocation2 + $0x18] sm:$0xff]
    %v116 = vld [vmem:[#allocation2 + $0x20] sm:$0xff]
    %v117 = vld [vmem:[%s1 + $0x30] sm:$0xff]
    %v118 = vld [vmem:[%s1 + $0x38] sm:$0xff]
    %v119 = vld [vmem:[%s1 + $0x40] sm:$0xff]
    %v120 = vld [vmem:[%s1 + $0x48] sm:$0xff]
    %v122 = vsel %vm96, %v113, 0
    %v125 = vsel %vm96, %v114, 0
    %v128 = vsel %vm96, %v115, 0
    %v131 = vsel %vm96, %v116, 0
    %133 = vmatpush.msra.mxu0 0.0
    %134 = vmatpush.msra.mxu0 0.0
    %135 = vmatpush.msra.mxu0 0.0
    %136 = vmatpush.msra.mxu0 0.0
    %137 = vmatpush.msra.mxu0 0.0
    %138 = vmatpush.msra.mxu0 0.0
    %139 = vmatpush.msra.mxu0 0.0
    %140 = vmatpush.msra.mxu0 0.0
    %141 = vmatpush.msra.mxu0 0.0
    %142 = vmatpush.msra.mxu0 0.0
    %143 = vmatpush.msra.mxu0 0.0
    %144 = vmatpush.msra.mxu0 0.0
    %145 = vmatpush.msra.mxu0 %v120
    %146 = vmatpush.msra.mxu0 %v119
    %147 = vmatpush.msra.mxu0 %v118
    %148 = vmatpush.msra.mxu0 %v117
    %149 = vmatmul.f32.gmra.mxu0 %v122
    %v150 = vpop.f32.mrf.mxu0
    %v151 = vadd.f32 0.0, %v150
    %152 = vmatmul.f32.gmra.mxu0 %v125
    %v153 = vpop.f32.mrf.mxu0
    %v154 = vadd.f32 0.0, %v153
    %155 = vmatmul.f32.gmra.mxu0 %v128
    %v156 = vpop.f32.mrf.mxu0
    %v157 = vadd.f32 0.0, %v156
    %158 = vmatmul.f32.gmra.mxu0 %v131
    %v159 = vpop.f32.mrf.mxu0
    %v160 = vadd.f32 0.0, %v159
    %161 = vdwg.mxu0
    %v163 = vsel %vm96, %v105, 0
    %v166 = vsel %vm96, %v106, 0
    %v169 = vsel %vm96, %v107, 0
    %v172 = vsel %vm96, %v108, 0
    %174 = vmatpush.msra.mxu0 0.0
    %175 = vmatpush.msra.mxu0 0.0
    %176 = vmatpush.msra.mxu0 0.0
    %177 = vmatpush.msra.mxu0 0.0
    %178 = vmatpush.msra.mxu0 0.0
    %179 = vmatpush.msra.mxu0 0.0
    %180 = vmatpush.msra.mxu0 0.0
    %181 = vmatpush.msra.mxu0 0.0
    %182 = vmatpush.msra.mxu0 0.0
    %183 = vmatpush.msra.mxu0 0.0
    %184 = vmatpush.msra.mxu0 0.0
    %185 = vmatpush.msra.mxu0 0.0
    %186 = vmatpush.msra.mxu0 %v112
    %187 = vmatpush.msra.mxu0 %v111
    %188 = vmatpush.msra.mxu0 %v110
    %189 = vmatpush.msra.mxu0 %v109
    %190 = vmatmul.f32.gmra.mxu0 %v163
    %v191 = vpop.f32.mrf.mxu0
    %v192 = vadd.f32 %v151, %v191
    %193 = vmatmul.f32.gmra.mxu0 %v166
    %v194 = vpop.f32.mrf.mxu0
    %v195 = vadd.f32 %v154, %v194
    %196 = vmatmul.f32.gmra.mxu0 %v169
    %v197 = vpop.f32.mrf.mxu0
    %v198 = vadd.f32 %v157, %v197
    %199 = vmatmul.f32.gmra.mxu0 %v172
    %v200 = vpop.f32.mrf.mxu0
    %v201 = vadd.f32 %v160, %v200
    %202 = vdwg.mxu0
    %v203 = vld [vmem:[#allocation2 + $0xa] sm:$0xff]
    %v204 = vld [vmem:[#allocation2 + $0x12] sm:$0xff]
    %v205 = vld [vmem:[#allocation2 + $0x1a] sm:$0xff]
    %v206 = vld [vmem:[#allocation2 + $0x22] sm:$0xff]
    %v207 = vld [vmem:[%s1 + $0x50] sm:$0xff]
    %v208 = vld [vmem:[%s1 + $0x58] sm:$0xff]
    %v209 = vld [vmem:[%s1 + $0x60] sm:$0xff]
    %v210 = vld [vmem:[%s1 + $0x68] sm:$0xff]
    %v212 = vsel %vm96, %v203, 0
    %v215 = vsel %vm96, %v204, 0
    %v218 = vsel %vm96, %v205, 0
    %v221 = vsel %vm96, %v206, 0
    %223 = vmatpush.msra.mxu0 0.0
    %224 = vmatpush.msra.mxu0 0.0
    %225 = vmatpush.msra.mxu0 0.0
    %226 = vmatpush.msra.mxu0 0.0
    %227 = vmatpush.msra.mxu0 0.0
    %228 = vmatpush.msra.mxu0 0.0
    %229 = vmatpush.msra.mxu0 0.0
    %230 = vmatpush.msra.mxu0 0.0
    %231 = vmatpush.msra.mxu0 0.0
    %232 = vmatpush.msra.mxu0 0.0
    %233 = vmatpush.msra.mxu0 0.0
    %234 = vmatpush.msra.mxu0 0.0
    %235 = vmatpush.msra.mxu0 %v210
    %236 = vmatpush.msra.mxu0 %v209
    %237 = vmatpush.msra.mxu0 %v208
    %238 = vmatpush.msra.mxu0 %v207
    %239 = vmatmul.f32.gmra.mxu0 %v212
    %v240 = vpop.f32.mrf.mxu0
    %v241 = vadd.f32 0.0, %v240
    %242 = vmatmul.f32.gmra.mxu0 %v215
    %v243 = vpop.f32.mrf.mxu0
    %v244 = vadd.f32 0.0, %v243
    %245 = vmatmul.f32.gmra.mxu0 %v218
    %v246 = vpop.f32.mrf.mxu0
    %v247 = vadd.f32 0.0, %v246
    %248 = vmatmul.f32.gmra.mxu0 %v221
    %v249 = vpop.f32.mrf.mxu0
    %v250 = vadd.f32 0.0, %v249
    %251 = vdwg.mxu0
    %v252 = vadd.f32 %v192, %v241
    %v253 = vadd.f32 %v195, %v244
    %v254 = vadd.f32 %v198, %v247
    %v255 = vadd.f32 %v201, %v250
    %v256 = vperm.slane %v104, 0
    %v257 = vadd.f32 %v256, %v252
    %v258 = vadd.f32 %v256, %v253
    %v259 = vadd.f32 %v256, %v254
    %v260 = vadd.f32 %v256, %v255
    %265 = vrot.lane.b32.xlu0 %v257, 96
    %v266 = vpop.permute.xlu0 %265
    %267 = vrot.lane.b32.xlu0 %v258, 96
    %v268 = vpop.permute.xlu0 %267
    %269 = vrot.lane.b32.xlu0 %v259, 96
    %v270 = vpop.permute.xlu0 %269
    %271 = vrot.lane.b32.xlu0 %v260, 96
    %v272 = vpop.permute.xlu0 %271
    %v277 = vmax.f32 %v257, %v266
    %v278 = vmax.f32 %v258, %v268
    %v279 = vmax.f32 %v259, %v270
    %v280 = vmax.f32 %v260, %v272
    %v281 = vmax.f32 %v277, 0.0
    %v282 = vmax.f32 %v278, 0.0
    %v283 = vmax.f32 %v279, 0.0
    %v284 = vmax.f32 %v280, 0.0
    %v285 = vld [vmem:[%s2] sm:$0xff]
    %v286 = vld [vmem:[%s2 + $0x8] sm:$0xff]
    %v287 = vld [vmem:[%s2 + $0x10] sm:$0xff]
    %v288 = vld [vmem:[%s2 + $0x18] sm:$0xff]
    %v289 = vld [vmem:[%s2 + $0x20] sm:$0xff]
    %v290 = vld [vmem:[%s2 + $0x28] sm:$0xff]
    %v291 = vld [vmem:[%s2 + $0x30] sm:$0xff]
    %v292 = vld [vmem:[%s2 + $0x38] sm:$0xff]
    %s293 = scalar_lea.vmem %s2, 192
    %v294 = vld [vmem:[%s293] ss:$8 sm:$0x3]
    %v296 = vperm.slane %v294, 0
    %v297 = vperm.slane %v294, 1
    %v301 = vsel %vm96, %v281, 0
    %v304 = vsel %vm96, %v282, 0
    %v307 = vsel %vm96, %v283, 0
    %v310 = vsel %vm96, %v284, 0
    %312 = vmatpush.msra.mxu0 0.0
    %313 = vmatpush.msra.mxu0 0.0
    %314 = vmatpush.msra.mxu0 0.0
    %315 = vmatpush.msra.mxu0 0.0
    %316 = vmatpush.msra.mxu0 0.0
    %317 = vmatpush.msra.mxu0 0.0
    %318 = vmatpush.msra.mxu0 0.0
    %319 = vmatpush.msra.mxu0 0.0
    %320 = vmatpush.msra.mxu0 0.0
    %321 = vmatpush.msra.mxu0 0.0
    %322 = vmatpush.msra.mxu0 0.0
    %323 = vmatpush.msra.mxu0 0.0
    %324 = vmatpush.msra.mxu0 %v291
    %325 = vmatpush.msra.mxu0 %v289
    %326 = vmatpush.msra.mxu0 %v287
    %327 = vmatpush.msra.mxu0 %v285
    %328 = vmatmul.f32.gmra.mxu0 %v301
    %v329 = vpop.f32.mrf.mxu0
    %v330 = vadd.f32 %v296, %v329
    %331 = vmatmul.f32.gmra.mxu0 %v304
    %v332 = vpop.f32.mrf.mxu0
    %v333 = vadd.f32 %v296, %v332
    %334 = vmatmul.f32.gmra.mxu0 %v307
    %v335 = vpop.f32.mrf.mxu0
    %v336 = vadd.f32 %v296, %v335
    %337 = vmatmul.f32.gmra.mxu0 %v310
    %v338 = vpop.f32.mrf.mxu0
    %v339 = vadd.f32 %v296, %v338
    %340 = vdwg.mxu0
    %341 = vmatpush.msra.mxu0 0.0
    %342 = vmatpush.msra.mxu0 0.0
    %343 = vmatpush.msra.mxu0 0.0
    %344 = vmatpush.msra.mxu0 0.0
    %345 = vmatpush.msra.mxu0 0.0
    %346 = vmatpush.msra.mxu0 0.0
    %347 = vmatpush.msra.mxu0 0.0
    %348 = vmatpush.msra.mxu0 0.0
    %349 = vmatpush.msra.mxu0 0.0
    %350 = vmatpush.msra.mxu0 0.0
    %351 = vmatpush.msra.mxu0 0.0
    %352 = vmatpush.msra.mxu0 0.0
    %353 = vmatpush.msra.mxu0 %v292
    %354 = vmatpush.msra.mxu0 %v290
    %355 = vmatpush.msra.mxu0 %v288
    %356 = vmatpush.msra.mxu0 %v286
    %357 = vmatmul.f32.gmra.mxu0 %v301
    %v358 = vpop.f32.mrf.mxu0
    %v359 = vadd.f32 %v297, %v358
    %360 = vmatmul.f32.gmra.mxu0 %v304
    %v361 = vpop.f32.mrf.mxu0
    %v362 = vadd.f32 %v297, %v361
    %363 = vmatmul.f32.gmra.mxu0 %v307
    %v364 = vpop.f32.mrf.mxu0
    %v365 = vadd.f32 %v297, %v364
    %366 = vmatmul.f32.gmra.mxu0 %v310
    %v367 = vpop.f32.mrf.mxu0
    %v368 = vadd.f32 %v297, %v367
    %369 = vdwg.mxu0
    %v370 = vld [vmem:[%s2 + $0x40] sm:$0xff]
    %v371 = vld [vmem:[%s2 + $0x48] sm:$0xff]
    %v372 = vld [vmem:[%s2 + $0x50] sm:$0xff]
    %v373 = vld [vmem:[%s2 + $0x58] sm:$0xff]
    %v374 = vld [vmem:[%s2 + $0x60] sm:$0xff]
    %v375 = vld [vmem:[%s2 + $0x68] sm:$0xff]
    %v376 = vld [vmem:[%s2 + $0x70] sm:$0xff]
    %v377 = vld [vmem:[%s2 + $0x78] sm:$0xff]
    %v378 = vld [vmem:[%s2 + $0x80] sm:$0xff]
    %v379 = vld [vmem:[%s2 + $0x88] sm:$0xff]
    %v380 = vld [vmem:[%s2 + $0x90] sm:$0xff]
    %v381 = vld [vmem:[%s2 + $0x98] sm:$0xff]
    %v382 = vld [vmem:[%s2 + $0xa0] sm:$0xff]
    %v383 = vld [vmem:[%s2 + $0xa8] sm:$0xff]
    %v384 = vld [vmem:[%s2 + $0xb0] sm:$0xff]
    %v385 = vld [vmem:[%s2 + $0xb8] sm:$0xff]
    %vm386 = vcmask 523264
    %v388 = vsel %vm386, 0.0, 0
    %390 = vmatpush.msra.mxu0 0.0
    %391 = vmatpush.msra.mxu0 0.0
    %392 = vmatpush.msra.mxu0 0.0
    %393 = vmatpush.msra.mxu0 0.0
    %394 = vmatpush.msra.mxu0 0.0
    %395 = vmatpush.msra.mxu0 0.0
    %396 = vmatpush.msra.mxu0 0.0
    %397 = vmatpush.msra.mxu0 0.0
    %398 = vmatpush.msra.mxu0 %v384
    %399 = vmatpush.msra.mxu0 %v382
    %400 = vmatpush.msra.mxu0 %v380
    %401 = vmatpush.msra.mxu0 %v378
    %402 = vmatpush.msra.mxu0 %v376
    %403 = vmatpush.msra.mxu0 %v374
    %404 = vmatpush.msra.mxu0 %v372
    %405 = vmatpush.msra.mxu0 %v370
    %406 = vmatmul.f32.gmra.mxu0 %v388
    %v407 = vpop.f32.mrf.mxu0
    %v408 = vadd.f32 0.0, %v407
    %409 = vdwg.mxu0
    %410 = vmatpush.msra.mxu0 0.0
    %411 = vmatpush.msra.mxu0 0.0
    %412 = vmatpush.msra.mxu0 0.0
    %413 = vmatpush.msra.mxu0 0.0
    %414 = vmatpush.msra.mxu0 0.0
    %415 = vmatpush.msra.mxu0 0.0
    %416 = vmatpush.msra.mxu0 0.0
    %417 = vmatpush.msra.mxu0 0.0
    %418 = vmatpush.msra.mxu0 %v385
    %419 = vmatpush.msra.mxu0 %v383
    %420 = vmatpush.msra.mxu0 %v381
    %421 = vmatpush.msra.mxu0 %v379
    %422 = vmatpush.msra.mxu0 %v377
    %423 = vmatpush.msra.mxu0 %v375
    %424 = vmatpush.msra.mxu0 %v373
    %425 = vmatpush.msra.mxu0 %v371
    %426 = vmatmul.f32.gmra.mxu0 %v388
    %v427 = vpop.f32.mrf.mxu0
    %v428 = vadd.f32 0.0, %v427
    %429 = vdwg.mxu0
    %v430 = vadd.f32 %v330, %v408
    %v431 = vadd.f32 %v359, %v428
    %v432 = vmul.f32 %v430, 0.5
    %v433 = vtanh.pop %v432
    %v434 = vmul.f32 %v433, 0.5
    %v435 = vadd.f32 %v434, 0.5
    %v436 = vtanh.pop %v431
    %v437 = vmul.f32 %v431, 0.5
    %v438 = vtanh.pop %v437
    %v439 = vmul.f32 %v438, 0.5
    %v440 = vadd.f32 %v439, 0.5
    %v441 = vmul.f32 %v435, 0.0
    %v442 = vmul.f32 %v435, %v436
    %444 = vrot.lane.b32.xlu0 %v442, 64
    %v445 = vpop.permute.xlu0 %444
    %v447 = vadd.f32 %v441, %v445
    %v448 = vtanh.pop %v447
    %v449 = vmul.f32 %v440, %v448
    %451 = vrot.lane.b32.xlu0 %v449, 64
    %v452 = vpop.permute.xlu0 %451
    %v453 = vsel %vm386, %v452, 0
    %455 = vmatpush.msra.mxu0 0.0
    %456 = vmatpush.msra.mxu0 0.0
    %457 = vmatpush.msra.mxu0 0.0
    %458 = vmatpush.msra.mxu0 0.0
    %459 = vmatpush.msra.mxu0 0.0
    %460 = vmatpush.msra.mxu0 0.0
    %461 = vmatpush.msra.mxu0 0.0
    %462 = vmatpush.msra.mxu0 0.0
    %463 = vmatpush.msra.mxu0 %v384
    %464 = vmatpush.msra.mxu0 %v382
    %465 = vmatpush.msra.mxu0 %v380
    %466 = vmatpush.msra.mxu0 %v378
    %467 = vmatpush.msra.mxu0 %v376
    %468 = vmatpush.msra.mxu0 %v374
    %469 = vmatpush.msra.mxu0 %v372
    %470 = vmatpush.msra.mxu0 %v370
    %471 = vmatmul.f32.gmra.mxu0 %v453
    %v472 = vpop.f32.mrf.mxu0
    %v473 = vadd.f32 0.0, %v472
    %474 = vdwg.mxu0
    %475 = vmatpush.msra.mxu0 0.0
    %476 = vmatpush.msra.mxu0 0.0
    %477 = vmatpush.msra.mxu0 0.0
    %478 = vmatpush.msra.mxu0 0.0
    %479 = vmatpush.msra.mxu0 0.0
    %480 = vmatpush.msra.mxu0 0.0
    %481 = vmatpush.msra.mxu0 0.0
    %482 = vmatpush.msra.mxu0 0.0
    %483 = vmatpush.msra.mxu0 %v385
    %484 = vmatpush.msra.mxu0 %v383
    %485 = vmatpush.msra.mxu0 %v381
    %486 = vmatpush.msra.mxu0 %v379
    %487 = vmatpush.msra.mxu0 %v377
    %488 = vmatpush.msra.mxu0 %v375
    %489 = vmatpush.msra.mxu0 %v373
    %490 = vmatpush.msra.mxu0 %v371
    %491 = vmatmul.f32.gmra.mxu0 %v453
    %v492 = vpop.f32.mrf.mxu0
    %v493 = vadd.f32 0.0, %v492
    %494 = vdwg.mxu0
    %v497 = vrot.slane %v473, 6
    %v498 = vrot.slane %v493, 6
    %v501 = vadd.f32 %v330, %v497
    %v502 = vadd.f32 %v359, %v498
    %v503 = vmul.f32 %v501, 0.5
    %v504 = vtanh.pop %v503
    %v505 = vmul.f32 %v504, 0.5
    %v506 = vadd.f32 %v505, 0.5
    %v507 = vtanh.pop %v502
    %v508 = vmul.f32 %v502, 0.5
    %v509 = vtanh.pop %v508
    %v510 = vmul.f32 %v509, 0.5
    %v511 = vadd.f32 %v510, 0.5
    %v513 = vrot.slane %v447, 6
    %v515 = vmul.f32 %v506, %v513
    %v516 = vmul.f32 %v506, %v507
    %518 = vrot.lane.b32.xlu0 %v516, 64
    %v519 = vpop.permute.xlu0 %518
    %v521 = vadd.f32 %v515, %v519
    %v522 = vtanh.pop %v521
    %v523 = vmul.f32 %v511, %v522
    %v525 = vrot.slane %v523, 2
    %526 = vrot.lane.b32.xlu0 %v525, 64
    %v527 = vpop.permute.xlu0 %526
    %v528 = vsel %vm386, %v527, 0
    %530 = vmatpush.msra.mxu0 0.0
    %531 = vmatpush.msra.mxu0 0.0
    %532 = vmatpush.msra.mxu0 0.0
    %533 = vmatpush.msra.mxu0 0.0
    %534 = vmatpush.msra.mxu0 0.0
    %535 = vmatpush.msra.mxu0 0.0
    %536 = vmatpush.msra.mxu0 0.0
    %537 = vmatpush.msra.mxu0 0.0
    %538 = vmatpush.msra.mxu0 %v384
    %539 = vmatpush.msra.mxu0 %v382
    %540 = vmatpush.msra.mxu0 %v380
    %541 = vmatpush.msra.mxu0 %v378
    %542 = vmatpush.msra.mxu0 %v376
    %543 = vmatpush.msra.mxu0 %v374
    %544 = vmatpush.msra.mxu0 %v372
    %545 = vmatpush.msra.mxu0 %v370
    %546 = vmatmul.f32.gmra.mxu0 %v528
    %v547 = vpop.f32.mrf.mxu0
    %v548 = vadd.f32 0.0, %v547
    %549 = vdwg.mxu0
    %550 = vmatpush.msra.mxu0 0.0
    %551 = vmatpush.msra.mxu0 0.0
    %552 = vmatpush.msra.mxu0 0.0
    %553 = vmatpush.msra.mxu0 0.0
    %554 = vmatpush.msra.mxu0 0.0
    %555 = vmatpush.msra.mxu0 0.0
    %556 = vmatpush.msra.mxu0 0.0
    %557 = vmatpush.msra.mxu0 0.0
    %558 = vmatpush.msra.mxu0 %v385
    %559 = vmatpush.msra.mxu0 %v383
    %560 = vmatpush.msra.mxu0 %v381
    %561 = vmatpush.msra.mxu0 %v379
    %562 = vmatpush.msra.mxu0 %v377
    %563 = vmatpush.msra.mxu0 %v375
    %564 = vmatpush.msra.mxu0 %v373
    %565 = vmatpush.msra.mxu0 %v371
    %566 = vmatmul.f32.gmra.mxu0 %v528
    %v567 = vpop.f32.mrf.mxu0
    %v568 = vadd.f32 0.0, %v567
    %569 = vdwg.mxu0
    %v572 = vrot.slane %v548, 4
    %v573 = vrot.slane %v568, 4
    %v576 = vadd.f32 %v330, %v572
    %v577 = vadd.f32 %v359, %v573
    %v578 = vmul.f32 %v576, 0.5
    %v579 = vtanh.pop %v578
    %v580 = vmul.f32 %v579, 0.5
    %v581 = vadd.f32 %v580, 0.5
    %v582 = vtanh.pop %v577
    %v583 = vmul.f32 %v577, 0.5
    %v584 = vtanh.pop %v583
    %v585 = vmul.f32 %v584, 0.5
    %v586 = vadd.f32 %v585, 0.5
    %v588 = vrot.slane %v521, 6
    %v590 = vmul.f32 %v581, %v588
    %v591 = vmul.f32 %v581, %v582
    %593 = vrot.lane.b32.xlu0 %v591, 64
    %v594 = vpop.permute.xlu0 %593
    %v596 = vadd.f32 %v590, %v594
    %v597 = vtanh.pop %v596
    %v598 = vmul.f32 %v586, %v597
    %v600 = vrot.slane %v598, 4
    %601 = vrot.lane.b32.xlu0 %v600, 64
    %v602 = vpop.permute.xlu0 %601
    %v603 = vsel %vm386, %v602, 0
    %605 = vmatpush.msra.mxu0 0.0
    %606 = vmatpush.msra.mxu0 0.0
    %607 = vmatpush.msra.mxu0 0.0
    %608 = vmatpush.msra.mxu0 0.0
    %609 = vmatpush.msra.mxu0 0.0
    %610 = vmatpush.msra.mxu0 0.0
    %611 = vmatpush.msra.mxu0 0.0
    %612 = vmatpush.msra.mxu0 0.0
    %613 = vmatpush.msra.mxu0 %v384
    %614 = vmatpush.msra.mxu0 %v382
    %615 = vmatpush.msra.mxu0 %v380
    %616 = vmatpush.msra.mxu0 %v378
    %617 = vmatpush.msra.mxu0 %v376
    %618 = vmatpush.msra.mxu0 %v374
    %619 = vmatpush.msra.mxu0 %v372
    %620 = vmatpush.msra.mxu0 %v370
    %621 = vmatmul.f32.gmra.mxu0 %v603
    %v622 = vpop.f32.mrf.mxu0
    %v623 = vadd.f32 0.0, %v622
    %624 = vdwg.mxu0
    %625 = vmatpush.msra.mxu0 0.0
    %626 = vmatpush.msra.mxu0 0.0
    %627 = vmatpush.msra.mxu0 0.0
    %628 = vmatpush.msra.mxu0 0.0
    %629 = vmatpush.msra.mxu0 0.0
    %630 = vmatpush.msra.mxu0 0.0
    %631 = vmatpush.msra.mxu0 0.0
    %632 = vmatpush.msra.mxu0 0.0
    %633 = vmatpush.msra.mxu0 %v385
    %634 = vmatpush.msra.mxu0 %v383
    %635 = vmatpush.msra.mxu0 %v381
    %636 = vmatpush.msra.mxu0 %v379
    %637 = vmatpush.msra.mxu0 %v377
    %638 = vmatpush.msra.mxu0 %v375
    %639 = vmatpush.msra.mxu0 %v373
    %640 = vmatpush.msra.mxu0 %v371
    %641 = vmatmul.f32.gmra.mxu0 %v603
    %v642 = vpop.f32.mrf.mxu0
    %v643 = vadd.f32 0.0, %v642
    %644 = vdwg.mxu0
    %v647 = vrot.slane %v623, 2
    %v648 = vrot.slane %v643, 2
    %v651 = vadd.f32 %v330, %v647
    %v652 = vadd.f32 %v359, %v648
    %v653 = vmul.f32 %v651, 0.5
    %v654 = vtanh.pop %v653
    %v655 = vmul.f32 %v654, 0.5
    %v656 = vadd.f32 %v655, 0.5
    %v657 = vtanh.pop %v652
    %v658 = vmul.f32 %v652, 0.5
    %v659 = vtanh.pop %v658
    %v660 = vmul.f32 %v659, 0.5
    %v661 = vadd.f32 %v660, 0.5
    %v663 = vrot.slane %v596, 6
    %v665 = vmul.f32 %v656, %v663
    %v666 = vmul.f32 %v656, %v657
    %668 = vrot.lane.b32.xlu0 %v666, 64
    %v669 = vpop.permute.xlu0 %668
    %v671 = vadd.f32 %v665, %v669
    %v672 = vtanh.pop %v671
    %v673 = vmul.f32 %v661, %v672
    %v675 = vrot.slane %v673, 6
    %676 = vrot.lane.b32.xlu0 %v675, 64
    %v677 = vpop.permute.xlu0 %676
    %v678 = vsel %vm386, %v677, 0
    %680 = vmatpush.msra.mxu0 0.0
    %681 = vmatpush.msra.mxu0 0.0
    %682 = vmatpush.msra.mxu0 0.0
    %683 = vmatpush.msra.mxu0 0.0
    %684 = vmatpush.msra.mxu0 0.0
    %685 = vmatpush.msra.mxu0 0.0
    %686 = vmatpush.msra.mxu0 0.0
    %687 = vmatpush.msra.mxu0 0.0
    %688 = vmatpush.msra.mxu0 %v384
    %689 = vmatpush.msra.mxu0 %v382
    %690 = vmatpush.msra.mxu0 %v380
    %691 = vmatpush.msra.mxu0 %v378
    %692 = vmatpush.msra.mxu0 %v376
    %693 = vmatpush.msra.mxu0 %v374
    %694 = vmatpush.msra.mxu0 %v372
    %695 = vmatpush.msra.mxu0 %v370
    %696 = vmatmul.f32.gmra.mxu0 %v678
    %v697 = vpop.f32.mrf.mxu0
    %v698 = vadd.f32 0.0, %v697
    %699 = vdwg.mxu0
    %700 = vmatpush.msra.mxu0 0.0
    %701 = vmatpush.msra.mxu0 0.0
    %702 = vmatpush.msra.mxu0 0.0
    %703 = vmatpush.msra.mxu0 0.0
    %704 = vmatpush.msra.mxu0 0.0
    %705 = vmatpush.msra.mxu0 0.0
    %706 = vmatpush.msra.mxu0 0.0
    %707 = vmatpush.msra.mxu0 0.0
    %708 = vmatpush.msra.mxu0 %v385
    %709 = vmatpush.msra.mxu0 %v383
    %710 = vmatpush.msra.mxu0 %v381
    %711 = vmatpush.msra.mxu0 %v379
    %712 = vmatpush.msra.mxu0 %v377
    %713 = vmatpush.msra.mxu0 %v375
    %714 = vmatpush.msra.mxu0 %v373
    %715 = vmatpush.msra.mxu0 %v371
    %716 = vmatmul.f32.gmra.mxu0 %v678
    %v717 = vpop.f32.mrf.mxu0
    %v718 = vadd.f32 0.0, %v717
    %719 = vdwg.mxu0
    %v720 = vadd.f32 %v333, %v698
    %v721 = vadd.f32 %v362, %v718
    %v722 = vmul.f32 %v720, 0.5
    %v723 = vtanh.pop %v722
    %v724 = vmul.f32 %v723, 0.5
    %v725 = vadd.f32 %v724, 0.5
    %v726 = vtanh.pop %v721
    %v727 = vmul.f32 %v721, 0.5
    %v728 = vtanh.pop %v727
    %v729 = vmul.f32 %v728, 0.5
    %v730 = vadd.f32 %v729, 0.5
    %v732 = vrot.slane %v671, 6
    %v734 = vmul.f32 %v725, %v732
    %v735 = vmul.f32 %v725, %v726
    %737 = vrot.lane.b32.xlu0 %v735, 64
    %v738 = vpop.permute.xlu0 %737
    %v740 = vadd.f32 %v734, %v738
    %v741 = vtanh.pop %v740
    %v742 = vmul.f32 %v730, %v741
    %744 = vrot.lane.b32.xlu0 %v742, 64
    %v745 = vpop.permute.xlu0 %744
    %v746 = vsel %vm386, %v745, 0
    %748 = vmatpush.msra.mxu0 0.0
    %749 = vmatpush.msra.mxu0 0.0
    %750 = vmatpush.msra.mxu0 0.0
    %751 = vmatpush.msra.mxu0 0.0
    %752 = vmatpush.msra.mxu0 0.0
    %753 = vmatpush.msra.mxu0 0.0
    %754 = vmatpush.msra.mxu0 0.0
    %755 = vmatpush.msra.mxu0 0.0
    %756 = vmatpush.msra.mxu0 %v384
    %757 = vmatpush.msra.mxu0 %v382
    %758 = vmatpush.msra.mxu0 %v380
    %759 = vmatpush.msra.mxu0 %v378
    %760 = vmatpush.msra.mxu0 %v376
    %761 = vmatpush.msra.mxu0 %v374
    %762 = vmatpush.msra.mxu0 %v372
    %763 = vmatpush.msra.mxu0 %v370
    %764 = vmatmul.f32.gmra.mxu0 %v746
    %v765 = vpop.f32.mrf.mxu0
    %v766 = vadd.f32 0.0, %v765
    %767 = vdwg.mxu0
    %768 = vmatpush.msra.mxu0 0.0
    %769 = vmatpush.msra.mxu0 0.0
    %770 = vmatpush.msra.mxu0 0.0
    %771 = vmatpush.msra.mxu0 0.0
    %772 = vmatpush.msra.mxu0 0.0
    %773 = vmatpush.msra.mxu0 0.0
    %774 = vmatpush.msra.mxu0 0.0
    %775 = vmatpush.msra.mxu0 0.0
    %776 = vmatpush.msra.mxu0 %v385
    %777 = vmatpush.msra.mxu0 %v383
    %778 = vmatpush.msra.mxu0 %v381
    %779 = vmatpush.msra.mxu0 %v379
    %780 = vmatpush.msra.mxu0 %v377
    %781 = vmatpush.msra.mxu0 %v375
    %782 = vmatpush.msra.mxu0 %v373
    %783 = vmatpush.msra.mxu0 %v371
    %784 = vmatmul.f32.gmra.mxu0 %v746
    %v785 = vpop.f32.mrf.mxu0
    %v786 = vadd.f32 0.0, %v785
    %787 = vdwg.mxu0
    %v790 = vrot.slane %v766, 6
    %v791 = vrot.slane %v786, 6
    %v794 = vadd.f32 %v333, %v790
    %v795 = vadd.f32 %v362, %v791
    %v796 = vmul.f32 %v794, 0.5
    %v797 = vtanh.pop %v796
    %v798 = vmul.f32 %v797, 0.5
    %v799 = vadd.f32 %v798, 0.5
    %v800 = vtanh.pop %v795
    %v801 = vmul.f32 %v795, 0.5
    %v802 = vtanh.pop %v801
    %v803 = vmul.f32 %v802, 0.5
    %v804 = vadd.f32 %v803, 0.5
    %v806 = vrot.slane %v740, 6
    %v808 = vmul.f32 %v799, %v806
    %v809 = vmul.f32 %v799, %v800
    %811 = vrot.lane.b32.xlu0 %v809, 64
    %v812 = vpop.permute.xlu0 %811
    %v814 = vadd.f32 %v808, %v812
    %v815 = vtanh.pop %v814
    %v816 = vmul.f32 %v804, %v815
    %v818 = vrot.slane %v816, 2
    %819 = vrot.lane.b32.xlu0 %v818, 64
    %v820 = vpop.permute.xlu0 %819
    %v821 = vsel %vm386, %v820, 0
    %823 = vmatpush.msra.mxu0 0.0
    %824 = vmatpush.msra.mxu0 0.0
    %825 = vmatpush.msra.mxu0 0.0
    %826 = vmatpush.msra.mxu0 0.0
    %827 = vmatpush.msra.mxu0 0.0
    %828 = vmatpush.msra.mxu0 0.0
    %829 = vmatpush.msra.mxu0 0.0
    %830 = vmatpush.msra.mxu0 0.0
    %831 = vmatpush.msra.mxu0 %v384
    %832 = vmatpush.msra.mxu0 %v382
    %833 = vmatpush.msra.mxu0 %v380
    %834 = vmatpush.msra.mxu0 %v378
    %835 = vmatpush.msra.mxu0 %v376
    %836 = vmatpush.msra.mxu0 %v374
    %837 = vmatpush.msra.mxu0 %v372
    %838 = vmatpush.msra.mxu0 %v370
    %839 = vmatmul.f32.gmra.mxu0 %v821
    %v840 = vpop.f32.mrf.mxu0
    %v841 = vadd.f32 0.0, %v840
    %842 = vdwg.mxu0
    %843 = vmatpush.msra.mxu0 0.0
    %844 = vmatpush.msra.mxu0 0.0
    %845 = vmatpush.msra.mxu0 0.0
    %846 = vmatpush.msra.mxu0 0.0
    %847 = vmatpush.msra.mxu0 0.0
    %848 = vmatpush.msra.mxu0 0.0
    %849 = vmatpush.msra.mxu0 0.0
    %850 = vmatpush.msra.mxu0 0.0
    %851 = vmatpush.msra.mxu0 %v385
    %852 = vmatpush.msra.mxu0 %v383
    %853 = vmatpush.msra.mxu0 %v381
    %854 = vmatpush.msra.mxu0 %v379
    %855 = vmatpush.msra.mxu0 %v377
    %856 = vmatpush.msra.mxu0 %v375
    %857 = vmatpush.msra.mxu0 %v373
    %858 = vmatpush.msra.mxu0 %v371
    %859 = vmatmul.f32.gmra.mxu0 %v821
    %v860 = vpop.f32.mrf.mxu0
    %v861 = vadd.f32 0.0, %v860
    %862 = vdwg.mxu0
    %v865 = vrot.slane %v841, 4
    %v866 = vrot.slane %v861, 4
    %v869 = vadd.f32 %v333, %v865
    %v870 = vadd.f32 %v362, %v866
    %v871 = vmul.f32 %v869, 0.5
    %v872 = vtanh.pop %v871
    %v873 = vmul.f32 %v872, 0.5
    %v874 = vadd.f32 %v873, 0.5
    %v875 = vtanh.pop %v870
    %v876 = vmul.f32 %v870, 0.5
    %v877 = vtanh.pop %v876
    %v878 = vmul.f32 %v877, 0.5
    %v879 = vadd.f32 %v878, 0.5
    %v881 = vrot.slane %v814, 6
    %v883 = vmul.f32 %v874, %v881
    %v884 = vmul.f32 %v874, %v875
    %886 = vrot.lane.b32.xlu0 %v884, 64
    %v887 = vpop.permute.xlu0 %886
    %v889 = vadd.f32 %v883, %v887
    %v890 = vtanh.pop %v889
    %v891 = vmul.f32 %v879, %v890
    %v893 = vrot.slane %v891, 4
    %894 = vrot.lane.b32.xlu0 %v893, 64
    %v895 = vpop.permute.xlu0 %894
    %v896 = vsel %vm386, %v895, 0
    %898 = vmatpush.msra.mxu0 0.0
    %899 = vmatpush.msra.mxu0 0.0
    %900 = vmatpush.msra.mxu0 0.0
    %901 = vmatpush.msra.mxu0 0.0
    %902 = vmatpush.msra.mxu0 0.0
    %903 = vmatpush.msra.mxu0 0.0
    %904 = vmatpush.msra.mxu0 0.0
    %905 = vmatpush.msra.mxu0 0.0
    %906 = vmatpush.msra.mxu0 %v384
    %907 = vmatpush.msra.mxu0 %v382
    %908 = vmatpush.msra.mxu0 %v380
    %909 = vmatpush.msra.mxu0 %v378
    %910 = vmatpush.msra.mxu0 %v376
    %911 = vmatpush.msra.mxu0 %v374
    %912 = vmatpush.msra.mxu0 %v372
    %913 = vmatpush.msra.mxu0 %v370
    %914 = vmatmul.f32.gmra.mxu0 %v896
    %v915 = vpop.f32.mrf.mxu0
    %v916 = vadd.f32 0.0, %v915
    %917 = vdwg.mxu0
    %918 = vmatpush.msra.mxu0 0.0
    %919 = vmatpush.msra.mxu0 0.0
    %920 = vmatpush.msra.mxu0 0.0
    %921 = vmatpush.msra.mxu0 0.0
    %922 = vmatpush.msra.mxu0 0.0
    %923 = vmatpush.msra.mxu0 0.0
    %924 = vmatpush.msra.mxu0 0.0
    %925 = vmatpush.msra.mxu0 0.0
    %926 = vmatpush.msra.mxu0 %v385
    %927 = vmatpush.msra.mxu0 %v383
    %928 = vmatpush.msra.mxu0 %v381
    %929 = vmatpush.msra.mxu0 %v379
    %930 = vmatpush.msra.mxu0 %v377
    %931 = vmatpush.msra.mxu0 %v375
    %932 = vmatpush.msra.mxu0 %v373
    %933 = vmatpush.msra.mxu0 %v371
    %934 = vmatmul.f32.gmra.mxu0 %v896
    %v935 = vpop.f32.mrf.mxu0
    %v936 = vadd.f32 0.0, %v935
    %937 = vdwg.mxu0
    %v940 = vrot.slane %v916, 2
    %v941 = vrot.slane %v936, 2
    %v944 = vadd.f32 %v333, %v940
    %v945 = vadd.f32 %v362, %v941
    %v946 = vmul.f32 %v944, 0.5
    %v947 = vtanh.pop %v946
    %v948 = vmul.f32 %v947, 0.5
    %v949 = vadd.f32 %v948, 0.5
    %v950 = vtanh.pop %v945
    %v951 = vmul.f32 %v945, 0.5
    %v952 = vtanh.pop %v951
    %v953 = vmul.f32 %v952, 0.5
    %v954 = vadd.f32 %v953, 0.5
    %v956 = vrot.slane %v889, 6
    %v958 = vmul.f32 %v949, %v956
    %v959 = vmul.f32 %v949, %v950
    %961 = vrot.lane.b32.xlu0 %v959, 64
    %v962 = vpop.permute.xlu0 %961
    %v964 = vadd.f32 %v958, %v962
    %v965 = vtanh.pop %v964
    %v966 = vmul.f32 %v954, %v965
    %v968 = vrot.slane %v966, 6
    %969 = vrot.lane.b32.xlu0 %v968, 64
    %v970 = vpop.permute.xlu0 %969
    %v971 = vsel %vm386, %v970, 0
    %973 = vmatpush.msra.mxu0 0.0
    %974 = vmatpush.msra.mxu0 0.0
    %975 = vmatpush.msra.mxu0 0.0
    %976 = vmatpush.msra.mxu0 0.0
    %977 = vmatpush.msra.mxu0 0.0
    %978 = vmatpush.msra.mxu0 0.0
    %979 = vmatpush.msra.mxu0 0.0
    %980 = vmatpush.msra.mxu0 0.0
    %981 = vmatpush.msra.mxu0 %v384
    %982 = vmatpush.msra.mxu0 %v382
    %983 = vmatpush.msra.mxu0 %v380
    %984 = vmatpush.msra.mxu0 %v378
    %985 = vmatpush.msra.mxu0 %v376
    %986 = vmatpush.msra.mxu0 %v374
    %987 = vmatpush.msra.mxu0 %v372
    %988 = vmatpush.msra.mxu0 %v370
    %989 = vmatmul.f32.gmra.mxu0 %v971
    %v990 = vpop.f32.mrf.mxu0
    %v991 = vadd.f32 0.0, %v990
    %992 = vdwg.mxu0
    %993 = vmatpush.msra.mxu0 0.0
    %994 = vmatpush.msra.mxu0 0.0
    %995 = vmatpush.msra.mxu0 0.0
    %996 = vmatpush.msra.mxu0 0.0
    %997 = vmatpush.msra.mxu0 0.0
    %998 = vmatpush.msra.mxu0 0.0
    %999 = vmatpush.msra.mxu0 0.0
    %1000 = vmatpush.msra.mxu0 0.0
    %1001 = vmatpush.msra.mxu0 %v385
    %1002 = vmatpush.msra.mxu0 %v383
    %1003 = vmatpush.msra.mxu0 %v381
    %1004 = vmatpush.msra.mxu0 %v379
    %1005 = vmatpush.msra.mxu0 %v377
    %1006 = vmatpush.msra.mxu0 %v375
    %1007 = vmatpush.msra.mxu0 %v373
    %1008 = vmatpush.msra.mxu0 %v371
    %1009 = vmatmul.f32.gmra.mxu0 %v971
    %v1010 = vpop.f32.mrf.mxu0
    %v1011 = vadd.f32 0.0, %v1010
    %1012 = vdwg.mxu0
    %v1013 = vadd.f32 %v336, %v991
    %v1014 = vadd.f32 %v365, %v1011
    %v1015 = vmul.f32 %v1013, 0.5
    %v1016 = vtanh.pop %v1015
    %v1017 = vmul.f32 %v1016, 0.5
    %v1018 = vadd.f32 %v1017, 0.5
    %v1019 = vtanh.pop %v1014
    %v1020 = vmul.f32 %v1014, 0.5
    %v1021 = vtanh.pop %v1020
    %v1022 = vmul.f32 %v1021, 0.5
    %v1023 = vadd.f32 %v1022, 0.5
    %v1025 = vrot.slane %v964, 6
    %v1027 = vmul.f32 %v1018, %v1025
    %v1028 = vmul.f32 %v1018, %v1019
    %1030 = vrot.lane.b32.xlu0 %v1028, 64
    %v1031 = vpop.permute.xlu0 %1030
    %v1033 = vadd.f32 %v1027, %v1031
    %v1034 = vtanh.pop %v1033
    %v1035 = vmul.f32 %v1023, %v1034
    %1037 = vrot.lane.b32.xlu0 %v1035, 64
    %v1038 = vpop.permute.xlu0 %1037
    %v1039 = vsel %vm386, %v1038, 0
    %1041 = vmatpush.msra.mxu0 0.0
    %1042 = vmatpush.msra.mxu0 0.0
    %1043 = vmatpush.msra.mxu0 0.0
    %1044 = vmatpush.msra.mxu0 0.0
    %1045 = vmatpush.msra.mxu0 0.0
    %1046 = vmatpush.msra.mxu0 0.0
    %1047 = vmatpush.msra.mxu0 0.0
    %1048 = vmatpush.msra.mxu0 0.0
    %1049 = vmatpush.msra.mxu0 %v384
    %1050 = vmatpush.msra.mxu0 %v382
    %1051 = vmatpush.msra.mxu0 %v380
    %1052 = vmatpush.msra.mxu0 %v378
    %1053 = vmatpush.msra.mxu0 %v376
    %1054 = vmatpush.msra.mxu0 %v374
    %1055 = vmatpush.msra.mxu0 %v372
    %1056 = vmatpush.msra.mxu0 %v370
    %1057 = vmatmul.f32.gmra.mxu0 %v1039
    %v1058 = vpop.f32.mrf.mxu0
    %v1059 = vadd.f32 0.0, %v1058
    %1060 = vdwg.mxu0
    %1061 = vmatpush.msra.mxu0 0.0
    %1062 = vmatpush.msra.mxu0 0.0
    %1063 = vmatpush.msra.mxu0 0.0
    %1064 = vmatpush.msra.mxu0 0.0
    %1065 = vmatpush.msra.mxu0 0.0
    %1066 = vmatpush.msra.mxu0 0.0
    %1067 = vmatpush.msra.mxu0 0.0
    %1068 = vmatpush.msra.mxu0 0.0
    %1069 = vmatpush.msra.mxu0 %v385
    %1070 = vmatpush.msra.mxu0 %v383
    %1071 = vmatpush.msra.mxu0 %v381
    %1072 = vmatpush.msra.mxu0 %v379
    %1073 = vmatpush.msra.mxu0 %v377
    %1074 = vmatpush.msra.mxu0 %v375
    %1075 = vmatpush.msra.mxu0 %v373
    %1076 = vmatpush.msra.mxu0 %v371
    %1077 = vmatmul.f32.gmra.mxu0 %v1039
    %v1078 = vpop.f32.mrf.mxu0
    %v1079 = vadd.f32 0.0, %v1078
    %1080 = vdwg.mxu0
    %v1083 = vrot.slane %v1059, 6
    %v1084 = vrot.slane %v1079, 6
    %v1087 = vadd.f32 %v336, %v1083
    %v1088 = vadd.f32 %v365, %v1084
    %v1089 = vmul.f32 %v1087, 0.5
    %v1090 = vtanh.pop %v1089
    %v1091 = vmul.f32 %v1090, 0.5
    %v1092 = vadd.f32 %v1091, 0.5
    %v1093 = vtanh.pop %v1088
    %v1094 = vmul.f32 %v1088, 0.5
    %v1095 = vtanh.pop %v1094
    %v1096 = vmul.f32 %v1095, 0.5
    %v1097 = vadd.f32 %v1096, 0.5
    %v1099 = vrot.slane %v1033, 6
    %v1101 = vmul.f32 %v1092, %v1099
    %v1102 = vmul.f32 %v1092, %v1093
    %1104 = vrot.lane.b32.xlu0 %v1102, 64
    %v1105 = vpop.permute.xlu0 %1104
    %v1107 = vadd.f32 %v1101, %v1105
    %v1108 = vtanh.pop %v1107
    %v1109 = vmul.f32 %v1097, %v1108
    %v1111 = vrot.slane %v1109, 2
    %1112 = vrot.lane.b32.xlu0 %v1111, 64
    %v1113 = vpop.permute.xlu0 %1112
    %v1114 = vsel %vm386, %v1113, 0
    %1116 = vmatpush.msra.mxu0 0.0
    %1117 = vmatpush.msra.mxu0 0.0
    %1118 = vmatpush.msra.mxu0 0.0
    %1119 = vmatpush.msra.mxu0 0.0
    %1120 = vmatpush.msra.mxu0 0.0
    %1121 = vmatpush.msra.mxu0 0.0
    %1122 = vmatpush.msra.mxu0 0.0
    %1123 = vmatpush.msra.mxu0 0.0
    %1124 = vmatpush.msra.mxu0 %v384
    %1125 = vmatpush.msra.mxu0 %v382
    %1126 = vmatpush.msra.mxu0 %v380
    %1127 = vmatpush.msra.mxu0 %v378
    %1128 = vmatpush.msra.mxu0 %v376
    %1129 = vmatpush.msra.mxu0 %v374
    %1130 = vmatpush.msra.mxu0 %v372
    %1131 = vmatpush.msra.mxu0 %v370
    %1132 = vmatmul.f32.gmra.mxu0 %v1114
    %v1133 = vpop.f32.mrf.mxu0
    %v1134 = vadd.f32 0.0, %v1133
    %1135 = vdwg.mxu0
    %1136 = vmatpush.msra.mxu0 0.0
    %1137 = vmatpush.msra.mxu0 0.0
    %1138 = vmatpush.msra.mxu0 0.0
    %1139 = vmatpush.msra.mxu0 0.0
    %1140 = vmatpush.msra.mxu0 0.0
    %1141 = vmatpush.msra.mxu0 0.0
    %1142 = vmatpush.msra.mxu0 0.0
    %1143 = vmatpush.msra.mxu0 0.0
    %1144 = vmatpush.msra.mxu0 %v385
    %1145 = vmatpush.msra.mxu0 %v383
    %1146 = vmatpush.msra.mxu0 %v381
    %1147 = vmatpush.msra.mxu0 %v379
    %1148 = vmatpush.msra.mxu0 %v377
    %1149 = vmatpush.msra.mxu0 %v375
    %1150 = vmatpush.msra.mxu0 %v373
    %1151 = vmatpush.msra.mxu0 %v371
    %1152 = vmatmul.f32.gmra.mxu0 %v1114
    %v1153 = vpop.f32.mrf.mxu0
    %v1154 = vadd.f32 0.0, %v1153
    %1155 = vdwg.mxu0
    %v1158 = vrot.slane %v1134, 4
    %v1159 = vrot.slane %v1154, 4
    %v1162 = vadd.f32 %v336, %v1158
    %v1163 = vadd.f32 %v365, %v1159
    %v1164 = vmul.f32 %v1162, 0.5
    %v1165 = vtanh.pop %v1164
    %v1166 = vmul.f32 %v1165, 0.5
    %v1167 = vadd.f32 %v1166, 0.5
    %v1168 = vtanh.pop %v1163
    %v1169 = vmul.f32 %v1163, 0.5
    %v1170 = vtanh.pop %v1169
    %v1171 = vmul.f32 %v1170, 0.5
    %v1172 = vadd.f32 %v1171, 0.5
    %v1174 = vrot.slane %v1107, 6
    %v1176 = vmul.f32 %v1167, %v1174
    %v1177 = vmul.f32 %v1167, %v1168
    %1179 = vrot.lane.b32.xlu0 %v1177, 64
    %v1180 = vpop.permute.xlu0 %1179
    %v1182 = vadd.f32 %v1176, %v1180
    %v1183 = vtanh.pop %v1182
    %v1184 = vmul.f32 %v1172, %v1183
    %v1186 = vrot.slane %v1184, 4
    %1187 = vrot.lane.b32.xlu0 %v1186, 64
    %v1188 = vpop.permute.xlu0 %1187
    %v1189 = vsel %vm386, %v1188, 0
    %1191 = vmatpush.msra.mxu0 0.0
    %1192 = vmatpush.msra.mxu0 0.0
    %1193 = vmatpush.msra.mxu0 0.0
    %1194 = vmatpush.msra.mxu0 0.0
    %1195 = vmatpush.msra.mxu0 0.0
    %1196 = vmatpush.msra.mxu0 0.0
    %1197 = vmatpush.msra.mxu0 0.0
    %1198 = vmatpush.msra.mxu0 0.0
    %1199 = vmatpush.msra.mxu0 %v384
    %1200 = vmatpush.msra.mxu0 %v382
    %1201 = vmatpush.msra.mxu0 %v380
    %1202 = vmatpush.msra.mxu0 %v378
    %1203 = vmatpush.msra.mxu0 %v376
    %1204 = vmatpush.msra.mxu0 %v374
    %1205 = vmatpush.msra.mxu0 %v372
    %1206 = vmatpush.msra.mxu0 %v370
    %1207 = vmatmul.f32.gmra.mxu0 %v1189
    %v1208 = vpop.f32.mrf.mxu0
    %v1209 = vadd.f32 0.0, %v1208
    %1210 = vdwg.mxu0
    %1211 = vmatpush.msra.mxu0 0.0
    %1212 = vmatpush.msra.mxu0 0.0
    %1213 = vmatpush.msra.mxu0 0.0
    %1214 = vmatpush.msra.mxu0 0.0
    %1215 = vmatpush.msra.mxu0 0.0
    %1216 = vmatpush.msra.mxu0 0.0
    %1217 = vmatpush.msra.mxu0 0.0
    %1218 = vmatpush.msra.mxu0 0.0
    %1219 = vmatpush.msra.mxu0 %v385
    %1220 = vmatpush.msra.mxu0 %v383
    %1221 = vmatpush.msra.mxu0 %v381
    %1222 = vmatpush.msra.mxu0 %v379
    %1223 = vmatpush.msra.mxu0 %v377
    %1224 = vmatpush.msra.mxu0 %v375
    %1225 = vmatpush.msra.mxu0 %v373
    %1226 = vmatpush.msra.mxu0 %v371
    %1227 = vmatmul.f32.gmra.mxu0 %v1189
    %v1228 = vpop.f32.mrf.mxu0
    %v1229 = vadd.f32 0.0, %v1228
    %1230 = vdwg.mxu0
    %v1233 = vrot.slane %v1209, 2
    %v1234 = vrot.slane %v1229, 2
    %v1237 = vadd.f32 %v336, %v1233
    %v1238 = vadd.f32 %v365, %v1234
    %v1239 = vmul.f32 %v1237, 0.5
    %v1240 = vtanh.pop %v1239
    %v1241 = vmul.f32 %v1240, 0.5
    %v1242 = vadd.f32 %v1241, 0.5
    %v1243 = vtanh.pop %v1238
    %v1244 = vmul.f32 %v1238, 0.5
    %v1245 = vtanh.pop %v1244
    %v1246 = vmul.f32 %v1245, 0.5
    %v1247 = vadd.f32 %v1246, 0.5
    %v1249 = vrot.slane %v1182, 6
    %v1251 = vmul.f32 %v1242, %v1249
    %v1252 = vmul.f32 %v1242, %v1243
    %1254 = vrot.lane.b32.xlu0 %v1252, 64
    %v1255 = vpop.permute.xlu0 %1254
    %v1257 = vadd.f32 %v1251, %v1255
    %v1258 = vtanh.pop %v1257
    %v1259 = vmul.f32 %v1247, %v1258
    %v1261 = vrot.slane %v1259, 6
    %1262 = vrot.lane.b32.xlu0 %v1261, 64
    %v1263 = vpop.permute.xlu0 %1262
    %v1264 = vsel %vm386, %v1263, 0
    %1266 = vmatpush.msra.mxu0 0.0
    %1267 = vmatpush.msra.mxu0 0.0
    %1268 = vmatpush.msra.mxu0 0.0
    %1269 = vmatpush.msra.mxu0 0.0
    %1270 = vmatpush.msra.mxu0 0.0
    %1271 = vmatpush.msra.mxu0 0.0
    %1272 = vmatpush.msra.mxu0 0.0
    %1273 = vmatpush.msra.mxu0 0.0
    %1274 = vmatpush.msra.mxu0 %v384
    %1275 = vmatpush.msra.mxu0 %v382
    %1276 = vmatpush.msra.mxu0 %v380
    %1277 = vmatpush.msra.mxu0 %v378
    %1278 = vmatpush.msra.mxu0 %v376
    %1279 = vmatpush.msra.mxu0 %v374
    %1280 = vmatpush.msra.mxu0 %v372
    %1281 = vmatpush.msra.mxu0 %v370
    %1282 = vmatmul.f32.gmra.mxu0 %v1264
    %v1283 = vpop.f32.mrf.mxu0
    %v1284 = vadd.f32 0.0, %v1283
    %1285 = vdwg.mxu0
    %1286 = vmatpush.msra.mxu0 0.0
    %1287 = vmatpush.msra.mxu0 0.0
    %1288 = vmatpush.msra.mxu0 0.0
    %1289 = vmatpush.msra.mxu0 0.0
    %1290 = vmatpush.msra.mxu0 0.0
    %1291 = vmatpush.msra.mxu0 0.0
    %1292 = vmatpush.msra.mxu0 0.0
    %1293 = vmatpush.msra.mxu0 0.0
    %1294 = vmatpush.msra.mxu0 %v385
    %1295 = vmatpush.msra.mxu0 %v383
    %1296 = vmatpush.msra.mxu0 %v381
    %1297 = vmatpush.msra.mxu0 %v379
    %1298 = vmatpush.msra.mxu0 %v377
    %1299 = vmatpush.msra.mxu0 %v375
    %1300 = vmatpush.msra.mxu0 %v373
    %1301 = vmatpush.msra.mxu0 %v371
    %1302 = vmatmul.f32.gmra.mxu0 %v1264
    %v1303 = vpop.f32.mrf.mxu0
    %v1304 = vadd.f32 0.0, %v1303
    %1305 = vdwg.mxu0
    %v1306 = vadd.f32 %v339, %v1284
    %v1307 = vadd.f32 %v368, %v1304
    %v1308 = vmul.f32 %v1306, 0.5
    %v1309 = vtanh.pop %v1308
    %v1310 = vmul.f32 %v1309, 0.5
    %v1311 = vadd.f32 %v1310, 0.5
    %v1312 = vtanh.pop %v1307
    %v1313 = vmul.f32 %v1307, 0.5
    %v1314 = vtanh.pop %v1313
    %v1315 = vmul.f32 %v1314, 0.5
    %v1316 = vadd.f32 %v1315, 0.5
    %v1318 = vrot.slane %v1257, 6
    %v1320 = vmul.f32 %v1311, %v1318
    %v1321 = vmul.f32 %v1311, %v1312
    %1323 = vrot.lane.b32.xlu0 %v1321, 64
    %v1324 = vpop.permute.xlu0 %1323
    %v1326 = vadd.f32 %v1320, %v1324
    %v1327 = vtanh.pop %v1326
    %v1328 = vmul.f32 %v1316, %v1327
    %1330 = vrot.lane.b32.xlu0 %v1328, 64
    %v1331 = vpop.permute.xlu0 %1330
    %v1332 = vsel %vm386, %v1331, 0
    %1334 = vmatpush.msra.mxu0 0.0
    %1335 = vmatpush.msra.mxu0 0.0
    %1336 = vmatpush.msra.mxu0 0.0
    %1337 = vmatpush.msra.mxu0 0.0
    %1338 = vmatpush.msra.mxu0 0.0
    %1339 = vmatpush.msra.mxu0 0.0
    %1340 = vmatpush.msra.mxu0 0.0
    %1341 = vmatpush.msra.mxu0 0.0
    %1342 = vmatpush.msra.mxu0 %v384
    %1343 = vmatpush.msra.mxu0 %v382
    %1344 = vmatpush.msra.mxu0 %v380
    %1345 = vmatpush.msra.mxu0 %v378
    %1346 = vmatpush.msra.mxu0 %v376
    %1347 = vmatpush.msra.mxu0 %v374
    %1348 = vmatpush.msra.mxu0 %v372
    %1349 = vmatpush.msra.mxu0 %v370
    %1350 = vmatmul.f32.gmra.mxu0 %v1332
    %v1351 = vpop.f32.mrf.mxu0
    %v1352 = vadd.f32 0.0, %v1351
    %1353 = vdwg.mxu0
    %1354 = vmatpush.msra.mxu0 0.0
    %1355 = vmatpush.msra.mxu0 0.0
    %1356 = vmatpush.msra.mxu0 0.0
    %1357 = vmatpush.msra.mxu0 0.0
    %1358 = vmatpush.msra.mxu0 0.0
    %1359 = vmatpush.msra.mxu0 0.0
    %1360 = vmatpush.msra.mxu0 0.0
    %1361 = vmatpush.msra.mxu0 0.0
    %1362 = vmatpush.msra.mxu0 %v385
    %1363 = vmatpush.msra.mxu0 %v383
    %1364 = vmatpush.msra.mxu0 %v381
    %1365 = vmatpush.msra.mxu0 %v379
    %1366 = vmatpush.msra.mxu0 %v377
    %1367 = vmatpush.msra.mxu0 %v375
    %1368 = vmatpush.msra.mxu0 %v373
    %1369 = vmatpush.msra.mxu0 %v371
    %1370 = vmatmul.f32.gmra.mxu0 %v1332
    %v1371 = vpop.f32.mrf.mxu0
    %v1372 = vadd.f32 0.0, %v1371
    %1373 = vdwg.mxu0
    %v1376 = vrot.slane %v1352, 6
    %v1377 = vrot.slane %v1372, 6
    %v1380 = vadd.f32 %v339, %v1376
    %v1381 = vadd.f32 %v368, %v1377
    %v1382 = vmul.f32 %v1380, 0.5
    %v1383 = vtanh.pop %v1382
    %v1384 = vmul.f32 %v1383, 0.5
    %v1385 = vadd.f32 %v1384, 0.5
    %v1386 = vtanh.pop %v1381
    %v1387 = vmul.f32 %v1381, 0.5
    %v1388 = vtanh.pop %v1387
    %v1389 = vmul.f32 %v1388, 0.5
    %v1390 = vadd.f32 %v1389, 0.5
    %v1392 = vrot.slane %v1326, 6
    %v1394 = vmul.f32 %v1385, %v1392
    %v1395 = vmul.f32 %v1385, %v1386
    %1397 = vrot.lane.b32.xlu0 %v1395, 64
    %v1398 = vpop.permute.xlu0 %1397
    %v1400 = vadd.f32 %v1394, %v1398
    %v1401 = vtanh.pop %v1400
    %v1402 = vmul.f32 %v1390, %v1401
    %v1404 = vrot.slane %v1402, 2
    %1405 = vrot.lane.b32.xlu0 %v1404, 64
    %v1406 = vpop.permute.xlu0 %1405
    %v1407 = vsel %vm386, %v1406, 0
    %1409 = vmatpush.msra.mxu0 0.0
    %1410 = vmatpush.msra.mxu0 0.0
    %1411 = vmatpush.msra.mxu0 0.0
    %1412 = vmatpush.msra.mxu0 0.0
    %1413 = vmatpush.msra.mxu0 0.0
    %1414 = vmatpush.msra.mxu0 0.0
    %1415 = vmatpush.msra.mxu0 0.0
    %1416 = vmatpush.msra.mxu0 0.0
    %1417 = vmatpush.msra.mxu0 %v384
    %1418 = vmatpush.msra.mxu0 %v382
    %1419 = vmatpush.msra.mxu0 %v380
    %1420 = vmatpush.msra.mxu0 %v378
    %1421 = vmatpush.msra.mxu0 %v376
    %1422 = vmatpush.msra.mxu0 %v374
    %1423 = vmatpush.msra.mxu0 %v372
    %1424 = vmatpush.msra.mxu0 %v370
    %1425 = vmatmul.f32.gmra.mxu0 %v1407
    %v1426 = vpop.f32.mrf.mxu0
    %v1427 = vadd.f32 0.0, %v1426
    %1428 = vdwg.mxu0
    %1429 = vmatpush.msra.mxu0 0.0
    %1430 = vmatpush.msra.mxu0 0.0
    %1431 = vmatpush.msra.mxu0 0.0
    %1432 = vmatpush.msra.mxu0 0.0
    %1433 = vmatpush.msra.mxu0 0.0
    %1434 = vmatpush.msra.mxu0 0.0
    %1435 = vmatpush.msra.mxu0 0.0
    %1436 = vmatpush.msra.mxu0 0.0
    %1437 = vmatpush.msra.mxu0 %v385
    %1438 = vmatpush.msra.mxu0 %v383
    %1439 = vmatpush.msra.mxu0 %v381
    %1440 = vmatpush.msra.mxu0 %v379
    %1441 = vmatpush.msra.mxu0 %v377
    %1442 = vmatpush.msra.mxu0 %v375
    %1443 = vmatpush.msra.mxu0 %v373
    %1444 = vmatpush.msra.mxu0 %v371
    %1445 = vmatmul.f32.gmra.mxu0 %v1407
    %v1446 = vpop.f32.mrf.mxu0
    %v1447 = vadd.f32 0.0, %v1446
    %1448 = vdwg.mxu0
    %v1451 = vrot.slane %v1427, 4
    %v1452 = vrot.slane %v1447, 4
    %v1455 = vadd.f32 %v339, %v1451
    %v1456 = vadd.f32 %v368, %v1452
    %v1457 = vmul.f32 %v1455, 0.5
    %v1458 = vtanh.pop %v1457
    %v1459 = vmul.f32 %v1458, 0.5
    %v1460 = vadd.f32 %v1459, 0.5
    %v1461 = vtanh.pop %v1456
    %v1462 = vmul.f32 %v1456, 0.5
    %v1463 = vtanh.pop %v1462
    %v1464 = vmul.f32 %v1463, 0.5
    %v1465 = vadd.f32 %v1464, 0.5
    %v1467 = vrot.slane %v1400, 6
    %v1469 = vmul.f32 %v1460, %v1467
    %v1470 = vmul.f32 %v1460, %v1461
    %1472 = vrot.lane.b32.xlu0 %v1470, 64
    %v1473 = vpop.permute.xlu0 %1472
    %v1475 = vadd.f32 %v1469, %v1473
    %v1476 = vtanh.pop %v1475
    %v1477 = vmul.f32 %v1465, %v1476
    %v1479 = vrot.slane %v1477, 4
    %1480 = vrot.lane.b32.xlu0 %v1479, 64
    %v1481 = vpop.permute.xlu0 %1480
    %v1482 = vsel %vm386, %v1481, 0
    %1484 = vmatpush.msra.mxu0 0.0
    %1485 = vmatpush.msra.mxu0 0.0
    %1486 = vmatpush.msra.mxu0 0.0
    %1487 = vmatpush.msra.mxu0 0.0
    %1488 = vmatpush.msra.mxu0 0.0
    %1489 = vmatpush.msra.mxu0 0.0
    %1490 = vmatpush.msra.mxu0 0.0
    %1491 = vmatpush.msra.mxu0 0.0
    %1492 = vmatpush.msra.mxu0 %v384
    %1493 = vmatpush.msra.mxu0 %v382
    %1494 = vmatpush.msra.mxu0 %v380
    %1495 = vmatpush.msra.mxu0 %v378
    %1496 = vmatpush.msra.mxu0 %v376
    %1497 = vmatpush.msra.mxu0 %v374
    %1498 = vmatpush.msra.mxu0 %v372
    %1499 = vmatpush.msra.mxu0 %v370
    %1500 = vmatmul.f32.gmra.mxu0 %v1482
    %v1501 = vpop.f32.mrf.mxu0
    %v1502 = vadd.f32 0.0, %v1501
    %1503 = vdwg.mxu0
    %1504 = vmatpush.msra.mxu0 0.0
    %1505 = vmatpush.msra.mxu0 0.0
    %1506 = vmatpush.msra.mxu0 0.0
    %1507 = vmatpush.msra.mxu0 0.0
    %1508 = vmatpush.msra.mxu0 0.0
    %1509 = vmatpush.msra.mxu0 0.0
    %1510 = vmatpush.msra.mxu0 0.0
    %1511 = vmatpush.msra.mxu0 0.0
    %1512 = vmatpush.msra.mxu0 %v385
    %1513 = vmatpush.msra.mxu0 %v383
    %1514 = vmatpush.msra.mxu0 %v381
    %1515 = vmatpush.msra.mxu0 %v379
    %1516 = vmatpush.msra.mxu0 %v377
    %1517 = vmatpush.msra.mxu0 %v375
    %1518 = vmatpush.msra.mxu0 %v373
    %1519 = vmatpush.msra.mxu0 %v371
    %1520 = vmatmul.f32.gmra.mxu0 %v1482
    %v1521 = vpop.f32.mrf.mxu0
    %v1522 = vadd.f32 0.0, %v1521
    %1523 = vdwg.mxu0
    %v1526 = vrot.slane %v1502, 2
    %v1527 = vrot.slane %v1522, 2
    %v1530 = vadd.f32 %v339, %v1526
    %v1531 = vadd.f32 %v368, %v1527
    %v1532 = vmul.f32 %v1530, 0.5
    %v1533 = vtanh.pop %v1532
    %v1534 = vmul.f32 %v1533, 0.5
    %v1535 = vadd.f32 %v1534, 0.5
    %v1536 = vtanh.pop %v1531
    %v1537 = vmul.f32 %v1531, 0.5
    %v1538 = vtanh.pop %v1537
    %v1539 = vmul.f32 %v1538, 0.5
    %v1540 = vadd.f32 %v1539, 0.5
    %v1542 = vrot.slane %v1475, 6
    %v1544 = vmul.f32 %v1535, %v1542
    %v1545 = vmul.f32 %v1535, %v1536
    %1547 = vrot.lane.b32.xlu0 %v1545, 64
    %v1548 = vpop.permute.xlu0 %1547
    %v1550 = vadd.f32 %v1544, %v1548
    %v1551 = vtanh.pop %v1550
    %v1552 = vmul.f32 %v1540, %v1551
    %v1553 = vld [vmem:[%s3] sm:$0xff]
    %v1554 = vld [vmem:[%s3 + $0x8] sm:$0xff]
    %v1555 = vld [vmem:[%s3 + $0x10] sm:$0xff]
    %v1556 = vld [vmem:[%s3 + $0x18] sm:$0xff]
    %v1557 = vld [vmem:[%s3 + $0x20] sm:$0xff]
    %v1558 = vld [vmem:[%s3 + $0x28] sm:$0xff]
    %v1559 = vld [vmem:[%s3 + $0x30] sm:$0xff]
    %v1560 = vld [vmem:[%s3 + $0x38] sm:$0xff]
    %v1561 = vld [vmem:[%s3 + $0x40] sm:$0x1]
    %v1562 = vperm.slane %v1561, 0
    %v1564 = vrot.slane %v1552, 6
    %1565 = vrot.lane.b32.xlu0 %v1564, 64
    %v1566 = vpop.permute.xlu0 %1565
    %v1567 = vsel %vm386, %v1566, 0
    %1569 = vmatpush.msra.mxu0 0.0
    %1570 = vmatpush.msra.mxu0 0.0
    %1571 = vmatpush.msra.mxu0 0.0
    %1572 = vmatpush.msra.mxu0 0.0
    %1573 = vmatpush.msra.mxu0 0.0
    %1574 = vmatpush.msra.mxu0 0.0
    %1575 = vmatpush.msra.mxu0 0.0
    %1576 = vmatpush.msra.mxu0 0.0
    %1577 = vmatpush.msra.mxu0 %v1560
    %1578 = vmatpush.msra.mxu0 %v1559
    %1579 = vmatpush.msra.mxu0 %v1558
    %1580 = vmatpush.msra.mxu0 %v1557
    %1581 = vmatpush.msra.mxu0 %v1556
    %1582 = vmatpush.msra.mxu0 %v1555
    %1583 = vmatpush.msra.mxu0 %v1554
    %1584 = vmatpush.msra.mxu0 %v1553
    %1585 = vmatmul.f32.gmra.mxu0 %v1567
    %v1586 = vpop.f32.mrf.mxu0
    %v1587 = vadd.f32 %v1562, %v1586
    %1588 = vdwg.mxu0
    %vm1589 = vcmask 9216
    %1590 = vst.msk [vmem:[#allocation3] sm:$0x3] %vm1589, %v1587
    // Predicated region
    $region18: #{cnn_lstm_forward.1} parent=1 // pred_check
      _
    $region19: #{cnn_lstm_forward.1} parent=1 // pred_check_branch
      %1592 = sbr.rel (0) target = $region21
    $region20: #{cnn_lstm_forward.1} parent=1 // pred_region
      %1594 = vsyncadd [#allocation4], 0
      %s1596 = sshll.u32 [#allocation3], 4
      %s1597 = int_to_ptr.vmem [resolvable:$true] %s1596
      %s1598 = sshll.u32 %s4, 4
      %s1599 = int_to_ptr.hbm [resolvable:$true] %s1598
      %1601 = dma.vmem_to_hbm [thread:$0]  %s1597, 32, %s1599, [#allocation4]
    $region21: #{cnn_lstm_forward.1} parent=1 // pred_fallthru
      _
    // Predicated region
    $region22: #{cnn_lstm_forward.1} parent=1 // pred_check
      _
    $region23: #{cnn_lstm_forward.1} parent=1 // pred_check_branch
      %1603 = sbr.rel (0) target = $region25
    $region24: #{cnn_lstm_forward.1} parent=1 // pred_region
      %1605 = dma.done [#allocation4], 32
    $region25: #{cnn_lstm_forward.1} parent=1 // pred_fallthru
      _
    %1606 = vsyncpa [#allocation4], 1

</llo_original>
